<compile_context>
chip_gen: v7x
topology: tpu7x:2x2x1
jax: 0.10.0
libtpu: 0.0.40
codegen_flags: <defaults>
</compile_context>

<pallas_src>
import functools
import math

import jax
import jax.numpy as jnp
from jax.experimental import pallas as pl
from jax.experimental.pallas import tpu as pltpu


def mha_kernel(x_ref, wq_ref, bq_ref, wk_ref, bk_ref, wv_ref, bv_ref,
               wo_ref, bo_ref, o_ref, k_scr, v_scr, z_scr, *,
               num_heads, compute_dtype):
    """Fused multi-head attention for one (batch, q-tile) grid step.

    x_ref : (1, S, d_model)     full sequence for this batch element
                                (constant block index across q-tiles)
    wq/wk/wv_ref: (d_model, d_k)  projection weights (in->out layout)
    bq/bk/bv_ref: (1, d_k)
    wo_ref: (d_k, d_model), bo_ref: (1, d_model)
    o_ref : (1, q_tile, d_model)
    k_scr, v_scr: VMEM (S, d_k) compute_dtype -- K/V cached across q-tiles.
    z_scr : VMEM (q_tile, d_k) compute_dtype -- per-head contexts, consumed
            by one full-width output-projection matmul.

    NOTE: the K/V-scratch reuse requires the q-tile grid axis to iterate
    sequentially ("arbitrary"); do NOT mark it "parallel".
    """
    qi = pl.program_id(1)
    q_tile = o_ref.shape[1]
    d_k = wq_ref.shape[1]
    sub = d_k // num_heads
    scale = 1.0 / math.sqrt(sub)

    # ---- K / V projections (+ ReLU) once per batch element ----
    @pl.when(qi == 0)
    def _():
        xf = x_ref[0].astype(compute_dtype)                    # (S, d_model)
        k = jnp.dot(xf, wk_ref[...].astype(compute_dtype),
                    preferred_element_type=jnp.float32) + bk_ref[...]
        v = jnp.dot(xf, wv_ref[...].astype(compute_dtype),
                    preferred_element_type=jnp.float32) + bv_ref[...]
        k_scr[...] = jnp.maximum(k, 0.0).astype(k_scr.dtype)
        v_scr[...] = jnp.maximum(v, 0.0).astype(v_scr.dtype)

    # ---- Q projection (+ ReLU) for this tile, sliced from the resident x ----
    row0 = pl.multiple_of(qi * q_tile, q_tile)
    xq = x_ref[0, pl.ds(row0, q_tile), :].astype(compute_dtype)  # (q_tile, dm)
    q = jnp.dot(xq, wq_ref[...].astype(compute_dtype),
                preferred_element_type=jnp.float32) + bq_ref[...]
    # fold 1/sqrt(sub) into q once (ReLU commutes with positive scaling)
    q = (jnp.maximum(q, 0.0) * scale).astype(compute_dtype)     # (q_tile, d_k)

    # ---- per-head attention with deferred softmax normalization ----
    for h in range(num_heads):                                  # static unroll
        lo = h * sub
        qh = q[:, lo:lo + sub]                                  # (q_tile, sub)
        kh = k_scr[:, lo:lo + sub]                              # (S, sub)
        vh = v_scr[:, lo:lo + sub]                              # (S, sub)
        # q @ k^T without materializing a transpose.
        s = jax.lax.dot_general(
            qh, kh, dimension_numbers=(((1,), (1,)), ((), ())),
            preferred_element_type=jnp.float32)                 # (q_tile, S)
        s = s - jnp.max(s, axis=-1, keepdims=True)
        p = jnp.exp(s)
        l = jnp.sum(p, axis=-1, keepdims=True)                  # (q_tile, 1)
        zh = jnp.dot(p.astype(compute_dtype), vh,
                     preferred_element_type=jnp.float32)        # unnormalized
        zh = zh * pl.reciprocal(l, approx=True)                 # EUP divide
        z_scr[:, lo:lo + sub] = zh.astype(z_scr.dtype)

    # ---- ONE full-contraction output projection (+ ReLU) ----
    out = jnp.dot(z_scr[...], wo_ref[...].astype(compute_dtype),
                  preferred_element_type=jnp.float32) + bo_ref[...]
    # TODO(synk): for d_model < 128 in production, present a lane-dense output
    # layout (fold B into lanes) to avoid masked vst.msk partial stores.
    o_ref[0] = jnp.maximum(out, 0.0).astype(o_ref.dtype)


@functools.partial(jax.jit, static_argnames=("num_heads", "q_tile"))
def multi_head_attention(x, wq, bq, wk, bk, wv, bv, wo, bo, *,
                         num_heads, q_tile=None):
    """x: (B, S, d_model); wq/wk/wv: (d_model, d_k); wo: (d_k, d_model);
    biases shaped (1, dim).  (Weights are the transpose of torch Linear's.)"""
    b, seq, d_model = x.shape
    d_k = wq.shape[1]
    assert d_k % num_heads == 0

    if q_tile is None:
        # Pick a VMEM-friendly tile instead of the whole sequence.
        q_tile = seq
        for cand in (512, 256, 128, 64, 32, 16, 8):
            if seq % cand == 0:
                q_tile = cand
                break
    assert seq % q_tile == 0 and (q_tile % 8 == 0 or q_tile == seq)
    nq = seq // q_tile

    compute_dtype = jnp.bfloat16       # MXU-native operands; f32 accumulation
    kernel = functools.partial(mha_kernel, num_heads=num_heads,
                               compute_dtype=compute_dtype)

    return pl.pallas_call(
        kernel,
        out_shape=jax.ShapeDtypeStruct((b, seq, d_model), x.dtype),
        grid_spec=pltpu.PrefetchScalarGridSpec(
            num_scalar_prefetch=0,
            grid=(b, nq),
            in_specs=[
                # full-sequence x block, constant across q-tiles
                pl.BlockSpec((1, seq, d_model), lambda i, j: (i, 0, 0)),
                pl.BlockSpec((d_model, d_k), lambda i, j: (0, 0)),   # wq
                pl.BlockSpec((1, d_k), lambda i, j: (0, 0)),         # bq
                pl.BlockSpec((d_model, d_k), lambda i, j: (0, 0)),   # wk
                pl.BlockSpec((1, d_k), lambda i, j: (0, 0)),         # bk
                pl.BlockSpec((d_model, d_k), lambda i, j: (0, 0)),   # wv
                pl.BlockSpec((1, d_k), lambda i, j: (0, 0)),         # bv
                pl.BlockSpec((d_k, d_model), lambda i, j: (0, 0)),   # wo
                pl.BlockSpec((1, d_model), lambda i, j: (0, 0)),     # bo
            ],
            out_specs=pl.BlockSpec((1, q_tile, d_model),
                                   lambda i, j: (i, j, 0)),
            scratch_shapes=[
                pltpu.VMEM((seq, d_k), compute_dtype),     # K cache (bf16)
                pltpu.VMEM((seq, d_k), compute_dtype),     # V cache (bf16)
                pltpu.VMEM((q_tile, d_k), compute_dtype),  # head contexts
            ],
        ),
        compiler_params=pltpu.CompilerParams(
            dimension_semantics=("parallel", "arbitrary"),
            # above v5e's 16 MiB scoped default, within v7x's 64 MiB physical
            vmem_limit_bytes=48 * 1024 * 1024),
    )(x, wq, bq, wk, bk, wv, bv, wo, bo)


def reference_forward(x, wq, bq, wk, bk, wv, bv, wo, bo, num_heads):
    """Pure-JAX mirror of the PyTorch MultiHeadAttention forward.
    Weights are in PyTorch nn.Linear layout (out, in)."""
    b, s, d_model = x.shape
    d_k = wq.shape[0]
    sub = d_k // num_heads

    q = jax.nn.relu(x @ wq.T + bq)
    k = jax.nn.relu(x @ wk.T + bk)
    v = jax.nn.relu(x @ wv.T + bv)

    def to_batches(t):
        return t.reshape(b, s, num_heads, sub).transpose(0, 2, 1, 3).reshape(
            b * num_heads, s, sub)

    qb, kb, vb = to_batches(q), to_batches(k), to_batches(v)
    scores = (qb @ jnp.swapaxes(kb, -2, -1)) / math.sqrt(sub)
    attn = jax.nn.softmax(scores, axis=-1)
    z = attn @ vb
    z = z.reshape(b, num_heads, s, sub).transpose(0, 2, 1, 3).reshape(b, s, d_k)
    return jax.nn.relu(z @ wo.T + bo)


if __name__ == "__main__":
    B, S, D_MODEL, D_K, H = 2, 16, 32, 32, 4   # sub_dim = 8
    Q_TILE = 8                                 # exercises K/V reuse across tiles

    key = jax.random.PRNGKey(0)
    kx, kwq, kbq, kwk, kbk, kwv, kbv, kwo, kbo = jax.random.split(key, 9)

    x = jax.random.normal(kx, (B, S, D_MODEL), dtype=jnp.float32)

    def linear_params(kw, kb, out_dim, in_dim):
        bound = 1.0 / math.sqrt(in_dim)
        w = jax.random.uniform(kw, (out_dim, in_dim), minval=-bound,
                               maxval=bound, dtype=jnp.float32)
        bias = jax.random.uniform(kb, (out_dim,), minval=-bound,
                                  maxval=bound, dtype=jnp.float32)
        return w, bias

    wq, bq = linear_params(kwq, kbq, D_K, D_MODEL)
    wk, bk = linear_params(kwk, kbk, D_K, D_MODEL)
    wv, bv = linear_params(kwv, kbv, D_K, D_MODEL)
    wo, bo = linear_params(kwo, kbo, D_MODEL, D_K)

    out = multi_head_attention(
        x,
        wq.T, bq.reshape(1, -1),
        wk.T, bk.reshape(1, -1),
        wv.T, bv.reshape(1, -1),
        wo.T, bo.reshape(1, -1),
        num_heads=H, q_tile=Q_TILE)
    out = jax.block_until_ready(out)

    ref = reference_forward(x, wq, bq, wk, bk, wv, bv, wo, bo, H)
    assert out.shape == (B, S, D_MODEL)
    # bf16 MXU operands + approx reciprocal -> tolerance loosened vs f32 ref.
    err = float(jnp.max(jnp.abs(out - ref)))
    assert err < 2e-2, f"max abs error {err}"

    print("KERNEL_OK")
</pallas_src>

<mosaic_0001>
module attributes {stable_mosaic.version = 11 : i64} {
  func.func @mha_kernel(%arg0: i32, %arg1: i32, %arg2: memref<1x16x32xf32, #tpu.memory_space<vmem>>, %arg3: memref<32x32xf32, #tpu.memory_space<vmem>>, %arg4: memref<1x32xf32, #tpu.memory_space<vmem>>, %arg5: memref<32x32xf32, #tpu.memory_space<vmem>>, %arg6: memref<1x32xf32, #tpu.memory_space<vmem>>, %arg7: memref<32x32xf32, #tpu.memory_space<vmem>>, %arg8: memref<1x32xf32, #tpu.memory_space<vmem>>, %arg9: memref<32x32xf32, #tpu.memory_space<vmem>>, %arg10: memref<1x32xf32, #tpu.memory_space<vmem>>, %arg11: memref<1x8x32xf32, #tpu.memory_space<vmem>>, %arg12: memref<16x32xbf16, #tpu.memory_space<vmem>>, %arg13: memref<16x32xbf16, #tpu.memory_space<vmem>>, %arg14: memref<8x32xbf16, #tpu.memory_space<vmem>>) attributes {dimension_semantics = [#tpu.dimension_semantics<parallel>, #tpu.dimension_semantics<arbitrary>], iteration_bounds = array<i64: 2, 2>, scalar_prefetch = 0 : i64, scratch_operands = 3 : i64, tpu.core_type = #tpu.core_type<tc>, window_params = [{transform_indices = @transform_0, window_bounds = array<i64: 1, 16, 32>}, {pipeline_mode = #tpu.pipeline_mode<synchronous>, transform_indices = @transform_1, window_bounds = array<i64: 32, 32>}, {pipeline_mode = #tpu.pipeline_mode<synchronous>, transform_indices = @transform_2, window_bounds = array<i64: 1, 32>}, {pipeline_mode = #tpu.pipeline_mode<synchronous>, transform_indices = @transform_3, window_bounds = array<i64: 32, 32>}, {pipeline_mode = #tpu.pipeline_mode<synchronous>, transform_indices = @transform_4, window_bounds = array<i64: 1, 32>}, {pipeline_mode = #tpu.pipeline_mode<synchronous>, transform_indices = @transform_5, window_bounds = array<i64: 32, 32>}, {pipeline_mode = #tpu.pipeline_mode<synchronous>, transform_indices = @transform_6, window_bounds = array<i64: 1, 32>}, {pipeline_mode = #tpu.pipeline_mode<synchronous>, transform_indices = @transform_7, window_bounds = array<i64: 32, 32>}, {pipeline_mode = #tpu.pipeline_mode<synchronous>, transform_indices = @transform_8, window_bounds = array<i64: 1, 32>}, {transform_indices = @transform_9, window_bounds = array<i64: 1, 8, 32>}]} {
    %c0_i32 = arith.constant 0 : i32
    %0 = arith.cmpi eq, %arg1, %c0_i32 : i32
    %1 = arith.extui %0 : i1 to i32
    %c0_i32_0 = arith.constant 0 : i32
    %2 = arith.cmpi ne, %1, %c0_i32_0 : i32
    scf.if %2 {
      %c0_56 = arith.constant 0 : index
      %c0_57 = arith.constant 0 : index
      %c0_58 = arith.constant 0 : index
      %104 = vector.load %arg2[%c0_56, %c0_57, %c0_58] : memref<1x16x32xf32, #tpu.memory_space<vmem>>, vector<1x16x32xf32>
      %105 = vector.shape_cast %104 : vector<1x16x32xf32> to vector<16x32xf32>
      %106 = arith.truncf %105 : vector<16x32xf32> to vector<16x32xbf16>
      %c0_59 = arith.constant 0 : index
      %c0_60 = arith.constant 0 : index
      %107 = vector.load %arg5[%c0_59, %c0_60] : memref<32x32xf32, #tpu.memory_space<vmem>>, vector<32x32xf32>
      %108 = arith.truncf %107 : vector<32x32xf32> to vector<32x32xbf16>
      %cst_61 = arith.constant dense<0.000000e+00> : vector<16x32xf32>
      %109 = tpu.matmul %106, %108, %cst_61 {dimension_numbers = #tpu.dot_dimension_numbers<[1], [0], [0], [1], [0, 0, 1, 1], [], []>} : vector<16x32xbf16>, vector<32x32xbf16>, vector<16x32xf32> -> vector<16x32xf32>
      %c0_62 = arith.constant 0 : index
      %c0_63 = arith.constant 0 : index
      %110 = vector.load %arg6[%c0_62, %c0_63] : memref<1x32xf32, #tpu.memory_space<vmem>>, vector<1x32xf32>
      %111 = vector.broadcast %110 : vector<1x32xf32> to vector<16x32xf32>
      %112 = arith.addf %109, %111 : vector<16x32xf32>
      %c0_64 = arith.constant 0 : index
      %c0_65 = arith.constant 0 : index
      %113 = vector.load %arg7[%c0_64, %c0_65] : memref<32x32xf32, #tpu.memory_space<vmem>>, vector<32x32xf32>
      %114 = arith.truncf %113 : vector<32x32xf32> to vector<32x32xbf16>
      %cst_66 = arith.constant dense<0.000000e+00> : vector<16x32xf32>
      %115 = tpu.matmul %106, %114, %cst_66 {dimension_numbers = #tpu.dot_dimension_numbers<[1], [0], [0], [1], [0, 0, 1, 1], [], []>} : vector<16x32xbf16>, vector<32x32xbf16>, vector<16x32xf32> -> vector<16x32xf32>
      %c0_67 = arith.constant 0 : index
      %c0_68 = arith.constant 0 : index
      %116 = vector.load %arg8[%c0_67, %c0_68] : memref<1x32xf32, #tpu.memory_space<vmem>>, vector<1x32xf32>
      %117 = vector.broadcast %116 : vector<1x32xf32> to vector<16x32xf32>
      %118 = arith.addf %115, %117 : vector<16x32xf32>
      %cst_69 = arith.constant 0.000000e+00 : f32
      %119 = vector.broadcast %cst_69 : f32 to vector<16x32xf32>
      %120 = arith.maximumf %112, %119 : vector<16x32xf32>
      %121 = arith.truncf %120 : vector<16x32xf32> to vector<16x32xbf16>
      %c0_70 = arith.constant 0 : index
      %c0_71 = arith.constant 0 : index
      %122 = vector.load %arg12[%c0_70, %c0_71] : memref<16x32xbf16, #tpu.memory_space<vmem>>, vector<16x32xbf16>
      tpu.vector_store %arg12[%c0_70, %c0_71], %121 {strides = array<i32>} : memref<16x32xbf16, #tpu.memory_space<vmem>>, vector<16x32xbf16>,
      %cst_72 = arith.constant 0.000000e+00 : f32
      %123 = vector.broadcast %cst_72 : f32 to vector<16x32xf32>
      %124 = arith.maximumf %118, %123 : vector<16x32xf32>
      %125 = arith.truncf %124 : vector<16x32xf32> to vector<16x32xbf16>
      %c0_73 = arith.constant 0 : index
      %c0_74 = arith.constant 0 : index
      %126 = vector.load %arg13[%c0_73, %c0_74] : memref<16x32xbf16, #tpu.memory_space<vmem>>, vector<16x32xbf16>
      tpu.vector_store %arg13[%c0_73, %c0_74], %125 {strides = array<i32>} : memref<16x32xbf16, #tpu.memory_space<vmem>>, vector<16x32xbf16>,
    } else {
    }
    %c8_i32 = arith.constant 8 : i32
    %3 = arith.muli %arg1, %c8_i32 : i32
    %4 = tpu.assume_multiple %3, 8 : i32
    %c0 = arith.constant 0 : index
    %5 = arith.index_cast %4 : i32 to index
    %c0_1 = arith.constant 0 : index
    %6 = vector.load %arg2[%c0, %5, %c0_1] : memref<1x16x32xf32, #tpu.memory_space<vmem>>, vector<1x8x32xf32>
    %7 = vector.shape_cast %6 : vector<1x8x32xf32> to vector<8x32xf32>
    %8 = arith.truncf %7 : vector<8x32xf32> to vector<8x32xbf16>
    %c0_2 = arith.constant 0 : index
    %c0_3 = arith.constant 0 : index
    %9 = vector.load %arg3[%c0_2, %c0_3] : memref<32x32xf32, #tpu.memory_space<vmem>>, vector<32x32xf32>
    %10 = arith.truncf %9 : vector<32x32xf32> to vector<32x32xbf16>
    %cst = arith.constant dense<0.000000e+00> : vector<8x32xf32>
    %11 = tpu.matmul %8, %10, %cst {dimension_numbers = #tpu.dot_dimension_numbers<[1], [0], [0], [1], [0, 0, 1, 1], [], []>} : vector<8x32xbf16>, vector<32x32xbf16>, vector<8x32xf32> -> vector<8x32xf32>
    %c0_4 = arith.constant 0 : index
    %c0_5 = arith.constant 0 : index
    %12 = vector.load %arg4[%c0_4, %c0_5] : memref<1x32xf32, #tpu.memory_space<vmem>>, vector<1x32xf32>
    %13 = vector.broadcast %12 : vector<1x32xf32> to vector<8x32xf32>
    %14 = arith.addf %11, %13 : vector<8x32xf32>
    %cst_6 = arith.constant 0.000000e+00 : f32
    %15 = vector.broadcast %cst_6 : f32 to vector<8x32xf32>
    %16 = arith.maximumf %14, %15 : vector<8x32xf32>
    %cst_7 = arith.constant 0.353553385 : f32
    %17 = vector.broadcast %cst_7 : f32 to vector<8x32xf32>
    %18 = arith.mulf %16, %17 : vector<8x32xf32>
    %19 = arith.truncf %18 : vector<8x32xf32> to vector<8x32xbf16>
    %20 = vector.extract_strided_slice %19 {offsets = [0, 0], sizes = [8, 8], strides = [1, 1]} : vector<8x32xbf16> to vector<8x8xbf16>
    %c0_8 = arith.constant 0 : index
    %c0_9 = arith.constant 0 : index
    %21 = vector.load %arg12[%c0_8, %c0_9] : memref<16x32xbf16, #tpu.memory_space<vmem>>, vector<16x8xbf16>
    %c0_10 = arith.constant 0 : index
    %c0_11 = arith.constant 0 : index
    %22 = vector.load %arg13[%c0_10, %c0_11] : memref<16x32xbf16, #tpu.memory_space<vmem>>, vector<16x8xbf16>
    %cst_12 = arith.constant dense<0.000000e+00> : vector<8x16xf32>
    %23 = tpu.matmul %20, %21, %cst_12 {dimension_numbers = #tpu.dot_dimension_numbers<[1], [1], [0], [0], [0, 0, 1, 0], [], []>} : vector<8x8xbf16>, vector<16x8xbf16>, vector<8x16xf32> -> vector<8x16xf32>
    %cst_13 = arith.constant dense<0xFF800000> : vector<8xf32>
    %24 = vector.multi_reduction <maximumf>, %23, %cst_13 [1] : vector<8x16xf32> to vector<8xf32>
    %25 = vector.shape_cast %24 : vector<8xf32> to vector<8x1xf32>
    %26 = vector.broadcast %25 : vector<8x1xf32> to vector<8x16xf32>
    %27 = arith.subf %23, %26 : vector<8x16xf32>
    %28 = math.exp %27 : vector<8x16xf32>
    %cst_14 = arith.constant dense<0.000000e+00> : vector<8xf32>
    %29 = vector.multi_reduction <add>, %28, %cst_14 [1] : vector<8x16xf32> to vector<8xf32>
    %30 = vector.shape_cast %29 : vector<8xf32> to vector<8x1xf32>
    %31 = arith.truncf %28 : vector<8x16xf32> to vector<8x16xbf16>
    %cst_15 = arith.constant dense<0.000000e+00> : vector<8x8xf32>
    %32 = tpu.matmul %31, %22, %cst_15 {dimension_numbers = #tpu.dot_dimension_numbers<[1], [0], [0], [1], [0, 0, 1, 1], [], []>} : vector<8x16xbf16>, vector<16x8xbf16>, vector<8x8xf32> -> vector<8x8xf32>
    %33 = tpu.reciprocal %30 {approx = true} : vector<8x1xf32> -> vector<8x1xf32>
    %34 = vector.broadcast %33 : vector<8x1xf32> to vector<8x8xf32>
    %35 = arith.mulf %32, %34 : vector<8x8xf32>
    %36 = arith.truncf %35 : vector<8x8xf32> to vector<8x8xbf16>
    %c0_16 = arith.constant 0 : index
    %c0_17 = arith.constant 0 : index
    %37 = vector.load %arg14[%c0_16, %c0_17] : memref<8x32xbf16, #tpu.memory_space<vmem>>, vector<8x8xbf16>
    tpu.vector_store %arg14[%c0_16, %c0_17], %36 {strides = array<i32>} : memref<8x32xbf16, #tpu.memory_space<vmem>>, vector<8x8xbf16>,
    %38 = vector.extract_strided_slice %19 {offsets = [0, 8], sizes = [8, 8], strides = [1, 1]} : vector<8x32xbf16> to vector<8x8xbf16>
    %c0_18 = arith.constant 0 : index
    %c8 = arith.constant 8 : index
    %39 = vector.load %arg12[%c0_18, %c8] : memref<16x32xbf16, #tpu.memory_space<vmem>>, vector<16x8xbf16>
    %c0_19 = arith.constant 0 : index
    %c8_20 = arith.constant 8 : index
    %40 = vector.load %arg13[%c0_19, %c8_20] : memref<16x32xbf16, #tpu.memory_space<vmem>>, vector<16x8xbf16>
    %cst_21 = arith.constant dense<0.000000e+00> : vector<8x16xf32>
    %41 = tpu.matmul %38, %39, %cst_21 {dimension_numbers = #tpu.dot_dimension_numbers<[1], [1], [0], [0], [0, 0, 1, 0], [], []>} : vector<8x8xbf16>, vector<16x8xbf16>, vector<8x16xf32> -> vector<8x16xf32>
    %cst_22 = arith.constant dense<0xFF800000> : vector<8xf32>
    %42 = vector.multi_reduction <maximumf>, %41, %cst_22 [1] : vector<8x16xf32> to vector<8xf32>
    %43 = vector.shape_cast %42 : vector<8xf32> to vector<8x1xf32>
    %44 = vector.broadcast %43 : vector<8x1xf32> to vector<8x16xf32>
    %45 = arith.subf %41, %44 : vector<8x16xf32>
    %46 = math.exp %45 : vector<8x16xf32>
    %cst_23 = arith.constant dense<0.000000e+00> : vector<8xf32>
    %47 = vector.multi_reduction <add>, %46, %cst_23 [1] : vector<8x16xf32> to vector<8xf32>
    %48 = vector.shape_cast %47 : vector<8xf32> to vector<8x1xf32>
    %49 = arith.truncf %46 : vector<8x16xf32> to vector<8x16xbf16>
    %cst_24 = arith.constant dense<0.000000e+00> : vector<8x8xf32>
    %50 = tpu.matmul %49, %40, %cst_24 {dimension_numbers = #tpu.dot_dimension_numbers<[1], [0], [0], [1], [0, 0, 1, 1], [], []>} : vector<8x16xbf16>, vector<16x8xbf16>, vector<8x8xf32> -> vector<8x8xf32>
    %51 = tpu.reciprocal %48 {approx = true} : vector<8x1xf32> -> vector<8x1xf32>
    %52 = vector.broadcast %51 : vector<8x1xf32> to vector<8x8xf32>
    %53 = arith.mulf %50, %52 : vector<8x8xf32>
    %54 = arith.truncf %53 : vector<8x8xf32> to vector<8x8xbf16>
    %c0_25 = arith.constant 0 : index
    %c8_26 = arith.constant 8 : index
    %55 = vector.load %arg14[%c0_25, %c8_26] : memref<8x32xbf16, #tpu.memory_space<vmem>>, vector<8x8xbf16>
    tpu.vector_store %arg14[%c0_25, %c8_26], %54 {strides = array<i32>} : memref<8x32xbf16, #tpu.memory_space<vmem>>, vector<8x8xbf16>,
    %56 = vector.extract_strided_slice %19 {offsets = [0, 16], sizes = [8, 8], strides = [1, 1]} : vector<8x32xbf16> to vector<8x8xbf16>
    %c0_27 = arith.constant 0 : index
    %c16 = arith.constant 16 : index
    %57 = vector.load %arg12[%c0_27, %c16] : memref<16x32xbf16, #tpu.memory_space<vmem>>, vector<16x8xbf16>
    %c0_28 = arith.constant 0 : index
    %c16_29 = arith.constant 16 : index
    %58 = vector.load %arg13[%c0_28, %c16_29] : memref<16x32xbf16, #tpu.memory_space<vmem>>, vector<16x8xbf16>
    %cst_30 = arith.constant dense<0.000000e+00> : vector<8x16xf32>
    %59 = tpu.matmul %56, %57, %cst_30 {dimension_numbers = #tpu.dot_dimension_numbers<[1], [1], [0], [0], [0, 0, 1, 0], [], []>} : vector<8x8xbf16>, vector<16x8xbf16>, vector<8x16xf32> -> vector<8x16xf32>
    %cst_31 = arith.constant dense<0xFF800000> : vector<8xf32>
    %60 = vector.multi_reduction <maximumf>, %59, %cst_31 [1] : vector<8x16xf32> to vector<8xf32>
    %61 = vector.shape_cast %60 : vector<8xf32> to vector<8x1xf32>
    %62 = vector.broadcast %61 : vector<8x1xf32> to vector<8x16xf32>
    %63 = arith.subf %59, %62 : vector<8x16xf32>
    %64 = math.exp %63 : vector<8x16xf32>
    %cst_32 = arith.constant dense<0.000000e+00> : vector<8xf32>
    %65 = vector.multi_reduction <add>, %64, %cst_32 [1] : vector<8x16xf32> to vector<8xf32>
    %66 = vector.shape_cast %65 : vector<8xf32> to vector<8x1xf32>
    %67 = arith.truncf %64 : vector<8x16xf32> to vector<8x16xbf16>
    %cst_33 = arith.constant dense<0.000000e+00> : vector<8x8xf32>
    %68 = tpu.matmul %67, %58, %cst_33 {dimension_numbers = #tpu.dot_dimension_numbers<[1], [0], [0], [1], [0, 0, 1, 1], [], []>} : vector<8x16xbf16>, vector<16x8xbf16>, vector<8x8xf32> -> vector<8x8xf32>
    %69 = tpu.reciprocal %66 {approx = true} : vector<8x1xf32> -> vector<8x1xf32>
    %70 = vector.broadcast %69 : vector<8x1xf32> to vector<8x8xf32>
    %71 = arith.mulf %68, %70 : vector<8x8xf32>
    %72 = arith.truncf %71 : vector<8x8xf32> to vector<8x8xbf16>
    %c0_34 = arith.constant 0 : index
    %c16_35 = arith.constant 16 : index
    %73 = vector.load %arg14[%c0_34, %c16_35] : memref<8x32xbf16, #tpu.memory_space<vmem>>, vector<8x8xbf16>
    tpu.vector_store %arg14[%c0_34, %c16_35], %72 {strides = array<i32>} : memref<8x32xbf16, #tpu.memory_space<vmem>>, vector<8x8xbf16>,
    %74 = vector.extract_strided_slice %19 {offsets = [0, 24], sizes = [8, 8], strides = [1, 1]} : vector<8x32xbf16> to vector<8x8xbf16>
    %c0_36 = arith.constant 0 : index
    %c24 = arith.constant 24 : index
    %75 = vector.load %arg12[%c0_36, %c24] : memref<16x32xbf16, #tpu.memory_space<vmem>>, vector<16x8xbf16>
    %c0_37 = arith.constant 0 : index
    %c24_38 = arith.constant 24 : index
    %76 = vector.load %arg13[%c0_37, %c24_38] : memref<16x32xbf16, #tpu.memory_space<vmem>>, vector<16x8xbf16>
    %cst_39 = arith.constant dense<0.000000e+00> : vector<8x16xf32>
    %77 = tpu.matmul %74, %75, %cst_39 {dimension_numbers = #tpu.dot_dimension_numbers<[1], [1], [0], [0], [0, 0, 1, 0], [], []>} : vector<8x8xbf16>, vector<16x8xbf16>, vector<8x16xf32> -> vector<8x16xf32>
    %cst_40 = arith.constant dense<0xFF800000> : vector<8xf32>
    %78 = vector.multi_reduction <maximumf>, %77, %cst_40 [1] : vector<8x16xf32> to vector<8xf32>
    %79 = vector.shape_cast %78 : vector<8xf32> to vector<8x1xf32>
    %80 = vector.broadcast %79 : vector<8x1xf32> to vector<8x16xf32>
    %81 = arith.subf %77, %80 : vector<8x16xf32>
    %82 = math.exp %81 : vector<8x16xf32>
    %cst_41 = arith.constant dense<0.000000e+00> : vector<8xf32>
    %83 = vector.multi_reduction <add>, %82, %cst_41 [1] : vector<8x16xf32> to vector<8xf32>
    %84 = vector.shape_cast %83 : vector<8xf32> to vector<8x1xf32>
    %85 = arith.truncf %82 : vector<8x16xf32> to vector<8x16xbf16>
    %cst_42 = arith.constant dense<0.000000e+00> : vector<8x8xf32>
    %86 = tpu.matmul %85, %76, %cst_42 {dimension_numbers = #tpu.dot_dimension_numbers<[1], [0], [0], [1], [0, 0, 1, 1], [], []>} : vector<8x16xbf16>, vector<16x8xbf16>, vector<8x8xf32> -> vector<8x8xf32>
    %87 = tpu.reciprocal %84 {approx = true} : vector<8x1xf32> -> vector<8x1xf32>
    %88 = vector.broadcast %87 : vector<8x1xf32> to vector<8x8xf32>
    %89 = arith.mulf %86, %88 : vector<8x8xf32>
    %90 = arith.truncf %89 : vector<8x8xf32> to vector<8x8xbf16>
    %c0_43 = arith.constant 0 : index
    %c24_44 = arith.constant 24 : index
    %91 = vector.load %arg14[%c0_43, %c24_44] : memref<8x32xbf16, #tpu.memory_space<vmem>>, vector<8x8xbf16>
    tpu.vector_store %arg14[%c0_43, %c24_44], %90 {strides = array<i32>} : memref<8x32xbf16, #tpu.memory_space<vmem>>, vector<8x8xbf16>,
    %c0_45 = arith.constant 0 : index
    %c0_46 = arith.constant 0 : index
    %92 = vector.load %arg14[%c0_45, %c0_46] : memref<8x32xbf16, #tpu.memory_space<vmem>>, vector<8x32xbf16>
    %c0_47 = arith.constant 0 : index
    %c0_48 = arith.constant 0 : index
    %93 = vector.load %arg9[%c0_47, %c0_48] : memref<32x32xf32, #tpu.memory_space<vmem>>, vector<32x32xf32>
    %94 = arith.truncf %93 : vector<32x32xf32> to vector<32x32xbf16>
    %cst_49 = arith.constant dense<0.000000e+00> : vector<8x32xf32>
    %95 = tpu.matmul %92, %94, %cst_49 {dimension_numbers = #tpu.dot_dimension_numbers<[1], [0], [0], [1], [0, 0, 1, 1], [], []>} : vector<8x32xbf16>, vector<32x32xbf16>, vector<8x32xf32> -> vector<8x32xf32>
    %c0_50 = arith.constant 0 : index
    %c0_51 = arith.constant 0 : index
    %96 = vector.load %arg10[%c0_50, %c0_51] : memref<1x32xf32, #tpu.memory_space<vmem>>, vector<1x32xf32>
    %97 = vector.broadcast %96 : vector<1x32xf32> to vector<8x32xf32>
    %98 = arith.addf %95, %97 : vector<8x32xf32>
    %cst_52 = arith.constant 0.000000e+00 : f32
    %99 = vector.broadcast %cst_52 : f32 to vector<8x32xf32>
    %100 = arith.maximumf %98, %99 : vector<8x32xf32>
    %c0_53 = arith.constant 0 : index
    %c0_54 = arith.constant 0 : index
    %c0_55 = arith.constant 0 : index
    %101 = vector.load %arg11[%c0_53, %c0_54, %c0_55] : memref<1x8x32xf32, #tpu.memory_space<vmem>>, vector<1x8x32xf32>
    %102 = vector.shape_cast %101 : vector<1x8x32xf32> to vector<8x32xf32>
    %103 = vector.shape_cast %100 : vector<8x32xf32> to vector<1x8x32xf32>
    tpu.vector_store %arg11[%c0_53, %c0_54, %c0_55], %103 {strides = array<i32>} : memref<1x8x32xf32, #tpu.memory_space<vmem>>, vector<1x8x32xf32>,
    return
  }
  func.func @transform_0(%arg0: i32, %arg1: i32) -> (i32, i32, i32) {
    %c0_i32 = arith.constant 0 : i32
    %c0_i32_0 = arith.constant 0 : i32
    %c0_i32_1 = arith.constant 0 : i32
    return %arg0, %c0_i32, %c0_i32_0 : i32, i32, i32
  }
  func.func @transform_1(%arg0: i32, %arg1: i32) -> (i32, i32) {
    %c0_i32 = arith.constant 0 : i32
    %c0_i32_0 = arith.constant 0 : i32
    %c0_i32_1 = arith.constant 0 : i32
    return %c0_i32, %c0_i32_0 : i32, i32
  }
  func.func @transform_2(%arg0: i32, %arg1: i32) -> (i32, i32) {
    %c0_i32 = arith.constant 0 : i32
    %c0_i32_0 = arith.constant 0 : i32
    %c0_i32_1 = arith.constant 0 : i32
    return %c0_i32, %c0_i32_0 : i32, i32
  }
  func.func @transform_3(%arg0: i32, %arg1: i32) -> (i32, i32) {
    %c0_i32 = arith.constant 0 : i32
    %c0_i32_0 = arith.constant 0 : i32
    %c0_i32_1 = arith.constant 0 : i32
    return %c0_i32, %c0_i32_0 : i32, i32
  }
  func.func @transform_4(%arg0: i32, %arg1: i32) -> (i32, i32) {
    %c0_i32 = arith.constant 0 : i32
    %c0_i32_0 = arith.constant 0 : i32
    %c0_i32_1 = arith.constant 0 : i32
    return %c0_i32, %c0_i32_0 : i32, i32
  }
  func.func @transform_5(%arg0: i32, %arg1: i32) -> (i32, i32) {
    %c0_i32 = arith.constant 0 : i32
    %c0_i32_0 = arith.constant 0 : i32
    %c0_i32_1 = arith.constant 0 : i32
    return %c0_i32, %c0_i32_0 : i32, i32
  }
  func.func @transform_6(%arg0: i32, %arg1: i32) -> (i32, i32) {
    %c0_i32 = arith.constant 0 : i32
    %c0_i32_0 = arith.constant 0 : i32
    %c0_i32_1 = arith.constant 0 : i32
    return %c0_i32, %c0_i32_0 : i32, i32
  }
  func.func @transform_7(%arg0: i32, %arg1: i32) -> (i32, i32) {
    %c0_i32 = arith.constant 0 : i32
    %c0_i32_0 = arith.constant 0 : i32
    %c0_i32_1 = arith.constant 0 : i32
    return %c0_i32, %c0_i32_0 : i32, i32
  }
  func.func @transform_8(%arg0: i32, %arg1: i32) -> (i32, i32) {
    %c0_i32 = arith.constant 0 : i32
    %c0_i32_0 = arith.constant 0 : i32
    %c0_i32_1 = arith.constant 0 : i32
    return %c0_i32, %c0_i32_0 : i32, i32
  }
  func.func @transform_9(%arg0: i32, %arg1: i32) -> (i32, i32, i32) {
    %c0_i32 = arith.constant 0 : i32
    %c0_i32_0 = arith.constant 0 : i32
    return %arg0, %arg1, %c0_i32 : i32, i32, i32
  }
}

</mosaic_0001>

<llo_original>
// kernel: multi_head_attention.1
$region0: #{multi_head_attention.1}
  #allocation0 [shape = 'u32[]', space=smem, size = 0x4, offset = 0x4, fixed_abs, tag = 'smem constant byte address 0x4 - core index']
  #allocation1 [shape = 'u32[144,128]{1,0:T(1,128)}', space=vmem, size = 0x12000, scoped, tag = 'internal scratch']
  #allocation2 [shape = 'bf16[16,32]{1,0:T(16,128)(2,1)}', space=vmem, size = 0x1000, scoped, tag = 'scratch operand']
  #allocation3 [shape = 'bf16[16,32]{1,0:T(16,128)(2,1)}', space=vmem, size = 0x1000, scoped, tag = 'scratch operand']
  #allocation4 [shape = 'bf16[8,32]{1,0:T(8,128)(2,1)}', space=vmem, size = 0x800, scoped, tag = 'scratch operand']
  %s0 = inlined_call_operand.hbm [shape: f32[2,16,32], index: 0, kind: input, shape index: {}]
  %s1 = inlined_call_operand.hbm [shape: f32[32,32], index: 1, kind: input, shape index: {}]
  %s2 = inlined_call_operand.vmem [shape: f32[1,32], index: 2, kind: input, shape index: {}]
  %s3 = inlined_call_operand.hbm [shape: f32[32,32], index: 3, kind: input, shape index: {}]
  %s4 = inlined_call_operand.vmem [shape: f32[1,32], index: 4, kind: input, shape index: {}]
  %s5 = inlined_call_operand.hbm [shape: f32[32,32], index: 5, kind: input, shape index: {}]
  %s6 = inlined_call_operand.vmem [shape: f32[1,32], index: 6, kind: input, shape index: {}]
  %s7 = inlined_call_operand.hbm [shape: f32[32,32], index: 7, kind: input, shape index: {}]
  %s8 = inlined_call_operand.vmem [shape: f32[1,32], index: 8, kind: input, shape index: {}]
  %s9 = inlined_call_operand.hbm [shape: f32[2,16,32], index: 9, kind: output, shape index: {}]
  %s10 = sld [smem:[#allocation0]]
  $region93: #{multi_head_attention.1} parent=0
    _
  %s12 = ssub.s32 1, %s10
  %s13 = scalar_select 0, %s12, %s10
  $region1: #{multi_head_attention.1} parent=0
    #allocation5 [shape = 'u8[16384]{0}', space=vmem, size = 0x4000, scoped, tag = 'input window, operand 0']
    #allocation6 [shape = 's32[2]{0}', space=sflag, size = 0x8, scoped, tag = 'scoped memory for multi_head_attention.1']
    #allocation7 [shape = 's32[2]{0}', space=sflag, size = 0x8, scoped, tag = 'scoped memory for multi_head_attention.1']
    #allocation8 [shape = 'u8[16384]{0}', space=vmem, size = 0x4000, scoped, tag = 'input window, operand 1, single buffered']
    #allocation9 [shape = 's32[1]{0}', space=sflag, size = 0x4, scoped, tag = 'scoped memory for multi_head_attention.1']
    #allocation10 [shape = 'u8[16384]{0}', space=vmem, size = 0x4000, scoped, tag = 'input window, operand 3, single buffered']
    #allocation11 [shape = 'u8[16384]{0}', space=vmem, size = 0x4000, scoped, tag = 'input window, operand 5, single buffered']
    #allocation12 [shape = 's32[1]{0}', space=sflag, size = 0x4, scoped, tag = 'scoped memory for multi_head_attention.1']
    #allocation13 [shape = 'u8[16384]{0}', space=vmem, size = 0x4000, scoped, tag = 'input window, operand 7, single buffered']
    #allocation14 [shape = 'u8[8192]{0}', space=vmem, size = 0x2000, scoped, tag = 'output window, operand 0']
    %14 = vsyncpa [#allocation6], 0
    %s15 = scalar_lea.sflag [#allocation6], 1
    %16 = vsyncpa %s15, 0
    %17 = vsyncpa [#allocation9], 0
    %18 = vsyncpa [#allocation12], 0
    %19 = vsyncpa [#allocation7], 0
    %s20 = scalar_lea.sflag [#allocation7], 1
    %21 = vsyncpa %s20, 0
    loop: start=0, step=1, limit=6
    $region2: #{multi_head_attention.1} parent=1 // loop_pre_header
      _
    $region3: #{multi_head_attention.1} parent=1 // loop_header
      %s23 = sphi 0, %s27
      %p24 = scmp.ge.s32.totalorder %s23, 6
      %s30 = sphi 0, %s42
      %s31 = sphi 0, %s38
      %s32 = sphi 0, %s30
      %s33 = sphi 0, %s31
      %s34 = sphi 0, %s32
      %s35 = sphi 0, %s33
      %s45 = sphi 0, %s47
      %s48 = sphi 0, %s45
      %s49 = sphi 0, %s48
      %s65 = sphi 0, %s49
      %s69 = sphi 0, %s69
      %s71 = sphi 0, %s69
      %s72 = sphi 0, %s71
      %s86 = sphi 0, %s72
      %s90 = sphi 0, %s90
      %s92 = sphi 0, %s90
      %s93 = sphi 0, %s92
      %s107 = sphi 0, %s93
      %s111 = sphi 0, %s111
      %s113 = sphi 0, %s111
      %s114 = sphi 0, %s113
      %s128 = sphi 0, %s114
      %s132 = sphi 0, %s132
      %s134 = sphi 0, %s132
      %s135 = sphi 0, %s134
      %s149 = sphi 0, %s135
      %s153 = sphi 0, %s153
      %s155 = sphi 0, %s153
      %s156 = sphi 0, %s155
      %s170 = sphi 0, %s156
      %s174 = sphi 0, %s174
      %s176 = sphi 0, %s174
      %s177 = sphi 0, %s176
      %s191 = sphi 0, %s177
      %s195 = sphi 0, %s195
      %s197 = sphi 0, %s195
      %s198 = sphi 0, %s197
      %s212 = sphi 0, %s198
      %s216 = sphi 0, %s216
      %s218 = sphi 0, %s216
      %s219 = sphi 0, %s218
      %s233 = sphi 0, %s219
      %s241 = sphi 0, %s243
      %s244 = sphi 0, %s241
      %s245 = sphi 0, %s244
      %s261 = sphi 0, %s245
    $region4: #{multi_head_attention.1} parent=1 // loop_header_branch
      %26 = sbr.rel (%p24) target = $region8
    $region5: #{multi_head_attention.1} parent=1 // loop_body
      %s28 = ssub.s32 %s23, 1
      %s29 = ssub.s32 %s23, 2
      %s36 = sadd.s32 1, %s31
      %p37 = scmp.ge.s32.totalorder %s36, 2
      %s38 = scalar_select %p37, 0, %s36
      %s39 = sadd.s32 1, %s30
      %s40 = scalar_select %p37, %s39, %s30
      %p41 = scmp.ge.s32.totalorder %s40, 2
      %s42 = scalar_select %p41, 0, %s40
      %s43 = ssub.s32 %s30, %s42
      %p44 = scmp.eq.s32.totalorder %s43, 0
      %s46 = sadd.s32 %s45, 1
      %s47 = scalar_select %p44, %s45, %s46
      %p50 = pneg %p44
      %p51 = scmp.eq.s32.totalorder %s23, 3
      %p52 = por %p50, %p51
      %p53 = scmp.ne.s32.totalorder %s45, %s48
      %p54 = scmp.eq.s32.totalorder %s23, 0
      %p55 = por %p53, %p54
      %p56 = scmp.ne.s32.totalorder %s45, %s48
      %p57 = scmp.eq.s32.totalorder %s28, 3
      %p58 = por %p56, %p57
      %p59 = scmp.ne.s32.totalorder %s48, %s49
      %p60 = scmp.eq.s32.totalorder %s28, 0
      %p61 = por %p59, %p60
      %p62 = scmp.ne.s32.totalorder %s48, %s49
      %p63 = scmp.eq.s32.totalorder %s29, 3
      %p64 = por %p62, %p63
      %p66 = scmp.ne.s32.totalorder %s49, %s65
      %p67 = scmp.eq.s32.totalorder %s29, 0
      %p68 = por %p66, %p67
      %s70 = sadd.s32 %s69, 1
      %p73 = scmp.eq.s32.totalorder %s23, 3
      %p74 = scmp.ne.s32.totalorder %s69, %s71
      %p75 = scmp.eq.s32.totalorder %s23, 0
      %p76 = por %p74, %p75
      %p77 = scmp.ne.s32.totalorder %s69, %s71
      %p78 = scmp.eq.s32.totalorder %s28, 3
      %p79 = por %p77, %p78
      %p80 = scmp.ne.s32.totalorder %s71, %s72
      %p81 = scmp.eq.s32.totalorder %s28, 0
      %p82 = por %p80, %p81
      %p83 = scmp.ne.s32.totalorder %s71, %s72
      %p84 = scmp.eq.s32.totalorder %s29, 3
      %p85 = por %p83, %p84
      %p87 = scmp.ne.s32.totalorder %s72, %s86
      %p88 = scmp.eq.s32.totalorder %s29, 0
      %p89 = por %p87, %p88
      %s91 = sadd.s32 %s90, 1
      %p94 = scmp.eq.s32.totalorder %s23, 3
      %p95 = scmp.ne.s32.totalorder %s90, %s92
      %p96 = scmp.eq.s32.totalorder %s23, 0
      %p97 = por %p95, %p96
      %p98 = scmp.ne.s32.totalorder %s90, %s92
      %p99 = scmp.eq.s32.totalorder %s28, 3
      %p100 = por %p98, %p99
      %p101 = scmp.ne.s32.totalorder %s92, %s93
      %p102 = scmp.eq.s32.totalorder %s28, 0
      %p103 = por %p101, %p102
      %p104 = scmp.ne.s32.totalorder %s92, %s93
      %p105 = scmp.eq.s32.totalorder %s29, 3
      %p106 = por %p104, %p105
      %p108 = scmp.ne.s32.totalorder %s93, %s107
      %p109 = scmp.eq.s32.totalorder %s29, 0
      %p110 = por %p108, %p109
      %s112 = sadd.s32 %s111, 1
      %p115 = scmp.eq.s32.totalorder %s23, 3
      %p116 = scmp.ne.s32.totalorder %s111, %s113
      %p117 = scmp.eq.s32.totalorder %s23, 0
      %p118 = por %p116, %p117
      %p119 = scmp.ne.s32.totalorder %s111, %s113
      %p120 = scmp.eq.s32.totalorder %s28, 3
      %p121 = por %p119, %p120
      %p122 = scmp.ne.s32.totalorder %s113, %s114
      %p123 = scmp.eq.s32.totalorder %s28, 0
      %p124 = por %p122, %p123
      %p125 = scmp.ne.s32.totalorder %s113, %s114
      %p126 = scmp.eq.s32.totalorder %s29, 3
      %p127 = por %p125, %p126
      %p129 = scmp.ne.s32.totalorder %s114, %s128
      %p130 = scmp.eq.s32.totalorder %s29, 0
      %p131 = por %p129, %p130
      %s133 = sadd.s32 %s132, 1
      %p136 = scmp.eq.s32.totalorder %s23, 3
      %p137 = scmp.ne.s32.totalorder %s132, %s134
      %p138 = scmp.eq.s32.totalorder %s23, 0
      %p139 = por %p137, %p138
      %p140 = scmp.ne.s32.totalorder %s132, %s134
      %p141 = scmp.eq.s32.totalorder %s28, 3
      %p142 = por %p140, %p141
      %p143 = scmp.ne.s32.totalorder %s134, %s135
      %p144 = scmp.eq.s32.totalorder %s28, 0
      %p145 = por %p143, %p144
      %p146 = scmp.ne.s32.totalorder %s134, %s135
      %p147 = scmp.eq.s32.totalorder %s29, 3
      %p148 = por %p146, %p147
      %p150 = scmp.ne.s32.totalorder %s135, %s149
      %p151 = scmp.eq.s32.totalorder %s29, 0
      %p152 = por %p150, %p151
      %s154 = sadd.s32 %s153, 1
      %p157 = scmp.eq.s32.totalorder %s23, 3
      %p158 = scmp.ne.s32.totalorder %s153, %s155
      %p159 = scmp.eq.s32.totalorder %s23, 0
      %p160 = por %p158, %p159
      %p161 = scmp.ne.s32.totalorder %s153, %s155
      %p162 = scmp.eq.s32.totalorder %s28, 3
      %p163 = por %p161, %p162
      %p164 = scmp.ne.s32.totalorder %s155, %s156
      %p165 = scmp.eq.s32.totalorder %s28, 0
      %p166 = por %p164, %p165
      %p167 = scmp.ne.s32.totalorder %s155, %s156
      %p168 = scmp.eq.s32.totalorder %s29, 3
      %p169 = por %p167, %p168
      %p171 = scmp.ne.s32.totalorder %s156, %s170
      %p172 = scmp.eq.s32.totalorder %s29, 0
      %p173 = por %p171, %p172
      %s175 = sadd.s32 %s174, 1
      %p178 = scmp.eq.s32.totalorder %s23, 3
      %p179 = scmp.ne.s32.totalorder %s174, %s176
      %p180 = scmp.eq.s32.totalorder %s23, 0
      %p181 = por %p179, %p180
      %p182 = scmp.ne.s32.totalorder %s174, %s176
      %p183 = scmp.eq.s32.totalorder %s28, 3
      %p184 = por %p182, %p183
      %p185 = scmp.ne.s32.totalorder %s176, %s177
      %p186 = scmp.eq.s32.totalorder %s28, 0
      %p187 = por %p185, %p186
      %p188 = scmp.ne.s32.totalorder %s176, %s177
      %p189 = scmp.eq.s32.totalorder %s29, 3
      %p190 = por %p188, %p189
      %p192 = scmp.ne.s32.totalorder %s177, %s191
      %p193 = scmp.eq.s32.totalorder %s29, 0
      %p194 = por %p192, %p193
      %s196 = sadd.s32 %s195, 1
      %p199 = scmp.eq.s32.totalorder %s23, 3
      %p200 = scmp.ne.s32.totalorder %s195, %s197
      %p201 = scmp.eq.s32.totalorder %s23, 0
      %p202 = por %p200, %p201
      %p203 = scmp.ne.s32.totalorder %s195, %s197
      %p204 = scmp.eq.s32.totalorder %s28, 3
      %p205 = por %p203, %p204
      %p206 = scmp.ne.s32.totalorder %s197, %s198
      %p207 = scmp.eq.s32.totalorder %s28, 0
      %p208 = por %p206, %p207
      %p209 = scmp.ne.s32.totalorder %s197, %s198
      %p210 = scmp.eq.s32.totalorder %s29, 3
      %p211 = por %p209, %p210
      %p213 = scmp.ne.s32.totalorder %s198, %s212
      %p214 = scmp.eq.s32.totalorder %s29, 0
      %p215 = por %p213, %p214
      %s217 = sadd.s32 %s216, 1
      %p220 = scmp.eq.s32.totalorder %s23, 3
      %p221 = scmp.ne.s32.totalorder %s216, %s218
      %p222 = scmp.eq.s32.totalorder %s23, 0
      %p223 = por %p221, %p222
      %p224 = scmp.ne.s32.totalorder %s216, %s218
      %p225 = scmp.eq.s32.totalorder %s28, 3
      %p226 = por %p224, %p225
      %p227 = scmp.ne.s32.totalorder %s218, %s219
      %p228 = scmp.eq.s32.totalorder %s28, 0
      %p229 = por %p227, %p228
      %p230 = scmp.ne.s32.totalorder %s218, %s219
      %p231 = scmp.eq.s32.totalorder %s29, 3
      %p232 = por %p230, %p231
      %p234 = scmp.ne.s32.totalorder %s219, %s233
      %p235 = scmp.eq.s32.totalorder %s29, 0
      %p236 = por %p234, %p235
      %s237 = ssub.s32 %s30, %s42
      %s238 = ssub.s32 %s31, %s38
      %s239 = sor.u32 %s237, %s238
      %p240 = scmp.eq.s32.totalorder %s239, 0
      %s242 = sadd.s32 %s241, 1
      %s243 = scalar_select %p240, %s241, %s242
      %p246 = pneg %p240
      %p247 = scmp.eq.s32.totalorder %s23, 3
      %p248 = por %p246, %p247
      %p249 = scmp.ne.s32.totalorder %s241, %s244
      %p250 = scmp.eq.s32.totalorder %s23, 0
      %p251 = por %p249, %p250
      %p252 = scmp.ne.s32.totalorder %s241, %s244
      %p253 = scmp.eq.s32.totalorder %s28, 3
      %p254 = por %p252, %p253
      %p255 = scmp.ne.s32.totalorder %s244, %s245
      %p256 = scmp.eq.s32.totalorder %s28, 0
      %p257 = por %p255, %p256
      %p258 = scmp.ne.s32.totalorder %s244, %s245
      %p259 = scmp.eq.s32.totalorder %s29, 3
      %p260 = por %p258, %p259
      %p262 = scmp.ne.s32.totalorder %s245, %s261
      %p263 = scmp.eq.s32.totalorder %s29, 0
      %p264 = por %p262, %p263
      %p265 = scmp.le.s32.totalorder 1, %s23
      %p266 = scmp.lt.s32.totalorder %s23, 5
      %p267 = pnand %p265, %p266
      %p268 = pneg %p267
      // Predicated region
      $region9: #{multi_head_attention.1} parent=5 // pred_check
        _
      $region10: #{multi_head_attention.1} parent=5 // pred_check_branch
        %270 = sbr.rel (%p267) target = $region12
      $region11: #{multi_head_attention.1} parent=5 // pred_region
        %s271 = ssub.s32 %s23, 1
        // Predicated region
        $region13: #{multi_head_attention.1} parent=11 // pred_check
          %p272 = pneg %p82
        $region14: #{multi_head_attention.1} parent=11 // pred_check_branch
          %274 = sbr.rel (%p272) target = $region16
        $region15: #{multi_head_attention.1} parent=11 // pred_region
          %s276 = ssub.s32 512, 512
          %277 = vsyncadd [#allocation9], %s276
          %s278 = sshll.u32 [#allocation8], 4
          %s279 = int_to_ptr.vmem [resolvable:$true] %s278
          %284 = dma.hbm_to_vmem [thread:$0]  %s1, 512, %s279, [#allocation9], 128, 128, 8
        $region16: #{multi_head_attention.1} parent=11 // pred_fallthru
          _
        // Predicated region
        $region17: #{multi_head_attention.1} parent=11 // pred_check
          %p285 = pneg %p103
        $region18: #{multi_head_attention.1} parent=11 // pred_check_branch
          %287 = sbr.rel (%p285) target = $region20
        $region19: #{multi_head_attention.1} parent=11 // pred_region
          _
        $region20: #{multi_head_attention.1} parent=11 // pred_fallthru
          _
        // Predicated region
        $region21: #{multi_head_attention.1} parent=11 // pred_check
          %p288 = pneg %p124
        $region22: #{multi_head_attention.1} parent=11 // pred_check_branch
          %290 = sbr.rel (%p288) target = $region24
        $region23: #{multi_head_attention.1} parent=11 // pred_region
          %s292 = ssub.s32 512, 512
          %293 = vsyncadd [#allocation9], %s292
          %s294 = sshll.u32 [#allocation10], 4
          %s295 = int_to_ptr.vmem [resolvable:$true] %s294
          %300 = dma.hbm_to_vmem [thread:$0]  %s3, 512, %s295, [#allocation9], 128, 128, 8
        $region24: #{multi_head_attention.1} parent=11 // pred_fallthru
          _
        // Predicated region
        $region25: #{multi_head_attention.1} parent=11 // pred_check
          %p301 = pneg %p145
        $region26: #{multi_head_attention.1} parent=11 // pred_check_branch
          %303 = sbr.rel (%p301) target = $region28
        $region27: #{multi_head_attention.1} parent=11 // pred_region
          _
        $region28: #{multi_head_attention.1} parent=11 // pred_fallthru
          _
        // Predicated region
        $region29: #{multi_head_attention.1} parent=11 // pred_check
          %p304 = pneg %p166
        $region30: #{multi_head_attention.1} parent=11 // pred_check_branch
          %306 = sbr.rel (%p304) target = $region32
        $region31: #{multi_head_attention.1} parent=11 // pred_region
          %s308 = ssub.s32 512, 512
          %309 = vsyncadd [#allocation12], %s308
          %s310 = sshll.u32 [#allocation11], 4
          %s311 = int_to_ptr.vmem [resolvable:$true] %s310
          %316 = dma.hbm_to_vmem [thread:$0]  %s5, 512, %s311, [#allocation12], 128, 128, 8
        $region32: #{multi_head_attention.1} parent=11 // pred_fallthru
          _
        // Predicated region
        $region33: #{multi_head_attention.1} parent=11 // pred_check
          %p317 = pneg %p187
        $region34: #{multi_head_attention.1} parent=11 // pred_check_branch
          %319 = sbr.rel (%p317) target = $region36
        $region35: #{multi_head_attention.1} parent=11 // pred_region
          _
        $region36: #{multi_head_attention.1} parent=11 // pred_fallthru
          _
        // Predicated region
        $region37: #{multi_head_attention.1} parent=11 // pred_check
          %p320 = pneg %p208
        $region38: #{multi_head_attention.1} parent=11 // pred_check_branch
          %322 = sbr.rel (%p320) target = $region40
        $region39: #{multi_head_attention.1} parent=11 // pred_region
          %s324 = ssub.s32 512, 512
          %325 = vsyncadd [#allocation12], %s324
          %s326 = sshll.u32 [#allocation13], 4
          %s327 = int_to_ptr.vmem [resolvable:$true] %s326
          %332 = dma.hbm_to_vmem [thread:$0]  %s7, 512, %s327, [#allocation12], 128, 128, 8
        $region40: #{multi_head_attention.1} parent=11 // pred_fallthru
          _
        // Predicated region
        $region41: #{multi_head_attention.1} parent=11 // pred_check
          %p333 = pneg %p229
        $region42: #{multi_head_attention.1} parent=11 // pred_check_branch
          %335 = sbr.rel (%p333) target = $region44
        $region43: #{multi_head_attention.1} parent=11 // pred_region
          _
        $region44: #{multi_head_attention.1} parent=11 // pred_fallthru
          _
      $region12: #{multi_head_attention.1} parent=5 // pred_fallthru
        _
      %p336 = scmp.lt.s32.totalorder %s23, 4
      // Predicated region
      $region45: #{multi_head_attention.1} parent=5 // pred_check
        %p337 = pneg %p336
      $region46: #{multi_head_attention.1} parent=5 // pred_check_branch
        %339 = sbr.rel (%p337) target = $region48
      $region47: #{multi_head_attention.1} parent=5 // pred_region
        // Predicated region
        $region49: #{multi_head_attention.1} parent=47 // pred_check
          %p340 = pneg %p55
        $region50: #{multi_head_attention.1} parent=47 // pred_check_branch
          %342 = sbr.rel (%p340) target = $region52
        $region51: #{multi_head_attention.1} parent=47 // pred_region
          %s343 = sand.u32 %s45, 1
          %s344 = scalar_lea.sflag [#allocation6], %s343
          %s345 = sand.u32 %s45, 1
          %s346 = smul.addr %s345, 16
          %s347 = scalar_lea.vmem [#allocation5], %s346
          %s349 = ssub.s32 256, 256
          %350 = vsyncadd %s344, %s349
          %s351 = smul.addr %s30, 2
          %s352 = smul.addr %s351, 128
          %s353 = scalar_lea.hbm %s0, %s352
          %s354 = sshll.u32 %s347, 4
          %s355 = int_to_ptr.vmem [resolvable:$true] %s354
          %360 = dma.hbm_to_vmem [thread:$0]  %s353, 256, %s355, %s344, 128, 128, 8
        $region52: #{multi_head_attention.1} parent=47 // pred_fallthru
          _
      $region48: #{multi_head_attention.1} parent=5 // pred_fallthru
        _
      %p361 = scmp.le.s32.totalorder 1, %s23
      %p362 = scmp.lt.s32.totalorder %s23, 5
      %p363 = pnand %p361, %p362
      %p364 = pneg %p363
      // Predicated region
      $region53: #{multi_head_attention.1} parent=5 // pred_check
        _
      $region54: #{multi_head_attention.1} parent=5 // pred_check_branch
        %366 = sbr.rel (%p363) target = $region56
      $region55: #{multi_head_attention.1} parent=5 // pred_region
        %s367 = ssub.s32 %s23, 1
        %s368 = sand.u32 %s48, 1
        %s369 = scalar_lea.sflag [#allocation6], %s368
        %s370 = sand.u32 %s48, 1
        %s371 = smul.addr %s370, 16
        %s372 = scalar_lea.vmem [#allocation5], %s371
        // Predicated region
        $region57: #{multi_head_attention.1} parent=55 // pred_check
          %p373 = pneg %p61
        $region58: #{multi_head_attention.1} parent=55 // pred_check_branch
          %375 = sbr.rel (%p373) target = $region60
        $region59: #{multi_head_attention.1} parent=55 // pred_region
          %376 = dma.done %s369, 256
        $region60: #{multi_head_attention.1} parent=55 // pred_fallthru
          _
        // Predicated region
        $region61: #{multi_head_attention.1} parent=55 // pred_check
          %p377 = pneg %p82
        $region62: #{multi_head_attention.1} parent=55 // pred_check_branch
          %379 = sbr.rel (%p377) target = $region64
        $region63: #{multi_head_attention.1} parent=55 // pred_region
          %380 = dma.done [#allocation9], 512
        $region64: #{multi_head_attention.1} parent=55 // pred_fallthru
          _
        // Predicated region
        $region65: #{multi_head_attention.1} parent=55 // pred_check
          %p381 = pneg %p124
        $region66: #{multi_head_attention.1} parent=55 // pred_check_branch
          %383 = sbr.rel (%p381) target = $region68
        $region67: #{multi_head_attention.1} parent=55 // pred_region
          %384 = dma.done [#allocation9], 512
        $region68: #{multi_head_attention.1} parent=55 // pred_fallthru
          _
        // Predicated region
        $region69: #{multi_head_attention.1} parent=55 // pred_check
          %p385 = pneg %p166
        $region70: #{multi_head_attention.1} parent=55 // pred_check_branch
          %387 = sbr.rel (%p385) target = $region72
        $region71: #{multi_head_attention.1} parent=55 // pred_region
          %388 = dma.done [#allocation12], 512
        $region72: #{multi_head_attention.1} parent=55 // pred_fallthru
          _
        // Predicated region
        $region73: #{multi_head_attention.1} parent=55 // pred_check
          %p389 = pneg %p208
        $region74: #{multi_head_attention.1} parent=55 // pred_check_branch
          %391 = sbr.rel (%p389) target = $region76
        $region75: #{multi_head_attention.1} parent=55 // pred_region
          %392 = dma.done [#allocation12], 512
        $region76: #{multi_head_attention.1} parent=55 // pred_fallthru
          _
        %s393 = sand.u32 %s48, 1
        %s394 = scalar_lea.sflag [#allocation6], %s393
        %s395 = sand.u32 %s48, 1
        %s396 = smul.addr %s395, 16
        %s397 = scalar_lea.vmem [#allocation5], %s396
        %p398 = pneg %p61
        %p399 = pneg %p58
        %p400 = pneg %p82
        %p401 = pneg %p79
        %p402 = pneg %p103
        %p403 = pneg %p100
        %p404 = pneg %p124
        %p405 = pneg %p121
        %p406 = pneg %p145
        %p407 = pneg %p142
        %p408 = pneg %p166
        %p409 = pneg %p163
        %p410 = pneg %p187
        %p411 = pneg %p184
        %p412 = pneg %p208
        %p413 = pneg %p205
        %p414 = pneg %p229
        %p415 = pneg %p226
        %p416 = pneg %p257
        %p417 = pneg %p254
        %s418 = sand.u32 %s244, 1
        %s419 = scalar_lea.sflag [#allocation7], %s418
        %s420 = sand.u32 %s244, 1
        %s421 = smul.addr %s420, 8
        %s422 = scalar_lea.vmem [#allocation14], %s421
        %p424 = scmp.eq.s32.totalorder %s33, 0
        // Predicated region
        $region77: #{multi_head_attention.1} parent=55 // pred_check
          %p425 = pneg %p424
        $region78: #{multi_head_attention.1} parent=55 // pred_check_branch
          %427 = sbr.rel (%p425) target = $region80
        $region79: #{multi_head_attention.1} parent=55 // pred_region
          %v428 = vld [vmem:[%s372] sm:$0xff]
          %v429 = vld [vmem:[%s372 + $0x8] sm:$0xff]
          %v430 = vpack.c.bf16 %v429, %v428
          %v431 = vld [vmem:[#allocation10] sm:$0xff]
          %v432 = vld [vmem:[#allocation10 + $0x8] sm:$0xff]
          %v433 = vld [vmem:[#allocation10 + $0x10] sm:$0xff]
          %v434 = vld [vmem:[#allocation10 + $0x18] sm:$0xff]
          %v435 = vpack.c.bf16 %v432, %v431
          %v436 = vpack.c.bf16 %v434, %v433
          %v437 = vld [vmem:[%s4] sm:$0x1]
          %v439 = vlaneseq
          %v440 = vshrl.u32 %v439, 7
          %v441 = vsub.s32 0, %v440
          %v442 = vrot.slane %v437, %v441
          %vm444 = vcmask 261120
          %v446 = vsel %vm444, %v430, 0
          %448 = vmatprep.subr.bf16.mxu0 0
          %449 = vmatpush1.bf16.msra.mxu0 %v435
          %450 = vmatprep.subr.bf16.mxu0 0
          %451 = vmatpush1.bf16.msra.mxu0 %v436
          %452 = vmatprep.subr.bf16.mxu0 0
          %453 = vmatpush1.bf16.msra.mxu0 0
          %454 = vmatprep.subr.bf16.mxu0 0
          %455 = vmatpush1.bf16.msra.mxu0 0
          %456 = vmatprep.subr.bf16.mxu0 0
          %457 = vmatpush1.bf16.msra.mxu0 0
          %458 = vmatprep.subr.bf16.mxu0 0
          %459 = vmatpush1.bf16.msra.mxu0 0
          %460 = vmatprep.subr.bf16.mxu0 0
          %461 = vmatpush1.bf16.msra.mxu0 0
          %462 = vmatprep.subr.bf16.mxu0 0
          %463 = vmatpush1.bf16.msra.mxu0 0
          %464 = vmatprep.subr.bf16.mxu0 0
          %465 = vmatpush1.bf16.msra.mxu0 0
          %466 = vmatprep.subr.bf16.mxu0 0
          %467 = vmatpush1.bf16.msra.mxu0 0
          %468 = vmatprep.subr.bf16.mxu0 0
          %469 = vmatpush1.bf16.msra.mxu0 0
          %470 = vmatprep.subr.bf16.mxu0 0
          %471 = vmatpush1.bf16.msra.mxu0 0
          %472 = vmatprep.subr.bf16.mxu0 0
          %473 = vmatpush1.bf16.msra.mxu0 0
          %474 = vmatprep.subr.bf16.mxu0 0
          %475 = vmatpush1.bf16.msra.mxu0 0
          %476 = vmatprep.subr.bf16.mxu0 0
          %477 = vmatpush1.bf16.msra.mxu0 0
          %478 = vmatprep.subr.bf16.mxu0 0
          %479 = vmatpush1.bf16.msra.mxu0 0
          %480 = vmatprep.mubr.bf16.mxu0 0
          %481 = vmatmul.mubr.bf16.gmra.mrb[0].mxu0 %v446
          %v482 = vpop.f32.mrb[0].mxu0
          %v483 = vadd.f32 %v442, %v482
          %v484 = vpop.f32.mrb[0].mxu0
          %v485 = vpop.f32.mrb[0].mxu0
          %v486 = vadd.f32 %v442, %v485
          %v487 = vpop.f32.mrb[0].mxu0
          %488 = vdwg.mxu0
          %v489 = vld [vmem:[#allocation11] sm:$0xff]
          %v490 = vld [vmem:[#allocation11 + $0x8] sm:$0xff]
          %v491 = vld [vmem:[#allocation11 + $0x10] sm:$0xff]
          %v492 = vld [vmem:[#allocation11 + $0x18] sm:$0xff]
          %v493 = vpack.c.bf16 %v490, %v489
          %v494 = vpack.c.bf16 %v492, %v491
          %v495 = vld [vmem:[%s6] sm:$0x1]
          %v497 = vlaneseq
          %v498 = vshrl.u32 %v497, 7
          %v499 = vsub.s32 0, %v498
          %v500 = vrot.slane %v495, %v499
          %502 = vmatprep.subr.bf16.mxu0 0
          %503 = vmatpush1.bf16.msra.mxu0 %v493
          %504 = vmatprep.subr.bf16.mxu0 0
          %505 = vmatpush1.bf16.msra.mxu0 %v494
          %506 = vmatprep.subr.bf16.mxu0 0
          %507 = vmatpush1.bf16.msra.mxu0 0
          %508 = vmatprep.subr.bf16.mxu0 0
          %509 = vmatpush1.bf16.msra.mxu0 0
          %510 = vmatprep.subr.bf16.mxu0 0
          %511 = vmatpush1.bf16.msra.mxu0 0
          %512 = vmatprep.subr.bf16.mxu0 0
          %513 = vmatpush1.bf16.msra.mxu0 0
          %514 = vmatprep.subr.bf16.mxu0 0
          %515 = vmatpush1.bf16.msra.mxu0 0
          %516 = vmatprep.subr.bf16.mxu0 0
          %517 = vmatpush1.bf16.msra.mxu0 0
          %518 = vmatprep.subr.bf16.mxu0 0
          %519 = vmatpush1.bf16.msra.mxu0 0
          %520 = vmatprep.subr.bf16.mxu0 0
          %521 = vmatpush1.bf16.msra.mxu0 0
          %522 = vmatprep.subr.bf16.mxu0 0
          %523 = vmatpush1.bf16.msra.mxu0 0
          %524 = vmatprep.subr.bf16.mxu0 0
          %525 = vmatpush1.bf16.msra.mxu0 0
          %526 = vmatprep.subr.bf16.mxu0 0
          %527 = vmatpush1.bf16.msra.mxu0 0
          %528 = vmatprep.subr.bf16.mxu0 0
          %529 = vmatpush1.bf16.msra.mxu0 0
          %530 = vmatprep.subr.bf16.mxu0 0
          %531 = vmatpush1.bf16.msra.mxu0 0
          %532 = vmatprep.subr.bf16.mxu0 0
          %533 = vmatpush1.bf16.msra.mxu0 0
          %534 = vmatprep.mubr.bf16.mxu0 0
          %535 = vmatmul.mubr.bf16.gmra.mrb[0].mxu0 %v446
          %v536 = vpop.f32.mrb[0].mxu0
          %v537 = vadd.f32 %v500, %v536
          %v538 = vpop.f32.mrb[0].mxu0
          %v539 = vpop.f32.mrb[0].mxu0
          %v540 = vadd.f32 %v500, %v539
          %v541 = vpop.f32.mrb[0].mxu0
          %542 = vdwg.mxu0
          %v543 = vmax.f32 %v483, 0.0
          %v544 = vmax.f32 %v486, 0.0
          %v545 = vpack.c.bf16 %v544, %v543
          %546 = vst.msk [vmem:[#allocation2] sm:$0xff] %vm444, %v545
          %v547 = vmax.f32 %v537, 0.0
          %v548 = vmax.f32 %v540, 0.0
          %v549 = vpack.c.bf16 %v548, %v547
          %550 = vst.msk [vmem:[#allocation3] sm:$0xff] %vm444, %v549
        $region80: #{multi_head_attention.1} parent=55 // pred_fallthru
          _
        %s551 = smul.u32 %s33, 8
        %s552 = scalar_lea.vmem %s372, %s551 [#allocation5]
        %v553 = vld [vmem:[%s552] sm:$0xff]
        %v554 = vpack.c.bf16 %v553, %v553
        %v555 = vld [vmem:[#allocation8] sm:$0xff]
        %v556 = vld [vmem:[#allocation8 + $0x8] sm:$0xff]
        %v557 = vld [vmem:[#allocation8 + $0x10] sm:$0xff]
        %v558 = vld [vmem:[#allocation8 + $0x18] sm:$0xff]
        %v559 = vpack.c.bf16 %v556, %v555
        %v560 = vpack.c.bf16 %v558, %v557
        %v561 = vld [vmem:[%s2] sm:$0x1]
        %v563 = vlaneseq
        %v564 = vshrl.u32 %v563, 7
        %v565 = vsub.s32 0, %v564
        %v566 = vrot.slane %v561, %v565
        %vm568 = vcmask 261120
        %v570 = vsel %vm568, %v554, 0
        %572 = vmatprep.subr.bf16.mxu0 0
        %573 = vmatpush1.bf16.msra.mxu0 %v559
        %574 = vmatprep.subr.bf16.mxu0 0
        %575 = vmatpush1.bf16.msra.mxu0 %v560
        %576 = vmatprep.subr.bf16.mxu0 0
        %577 = vmatpush1.bf16.msra.mxu0 0
        %578 = vmatprep.subr.bf16.mxu0 0
        %579 = vmatpush1.bf16.msra.mxu0 0
        %580 = vmatprep.subr.bf16.mxu0 0
        %581 = vmatpush1.bf16.msra.mxu0 0
        %582 = vmatprep.subr.bf16.mxu0 0
        %583 = vmatpush1.bf16.msra.mxu0 0
        %584 = vmatprep.subr.bf16.mxu0 0
        %585 = vmatpush1.bf16.msra.mxu0 0
        %586 = vmatprep.subr.bf16.mxu0 0
        %587 = vmatpush1.bf16.msra.mxu0 0
        %588 = vmatprep.subr.bf16.mxu0 0
        %589 = vmatpush1.bf16.msra.mxu0 0
        %590 = vmatprep.subr.bf16.mxu0 0
        %591 = vmatpush1.bf16.msra.mxu0 0
        %592 = vmatprep.subr.bf16.mxu0 0
        %593 = vmatpush1.bf16.msra.mxu0 0
        %594 = vmatprep.subr.bf16.mxu0 0
        %595 = vmatpush1.bf16.msra.mxu0 0
        %596 = vmatprep.subr.bf16.mxu0 0
        %597 = vmatpush1.bf16.msra.mxu0 0
        %598 = vmatprep.subr.bf16.mxu0 0
        %599 = vmatpush1.bf16.msra.mxu0 0
        %600 = vmatprep.subr.bf16.mxu0 0
        %601 = vmatpush1.bf16.msra.mxu0 0
        %602 = vmatprep.subr.bf16.mxu0 0
        %603 = vmatpush1.bf16.msra.mxu0 0
        %604 = vmatprep.mubr.bf16.mxu0 0
        %605 = vmatmul.mubr.bf16.gmra.mrb[0].mxu0 %v570
        %v606 = vpop.f32.mrb[0].mxu0
        %v607 = vadd.f32 %v566, %v606
        %v608 = vpop.f32.mrb[0].mxu0
        %v609 = vpop.f32.mrb[0].mxu0
        %v610 = vpop.f32.mrb[0].mxu0
        %611 = vdwg.mxu0
        %v612 = vmax.f32 %v607, 0.0
        %v613 = vmul.f32 %v612, 0.35355338
        %v614 = vpack.c.bf16 %v613, %v613
        %v615 = vld [vmem:[#allocation2] sm:$0xff]
        %v616 = vld [vmem:[#allocation3] sm:$0xff]
        %vm617 = vcmask 64512
        %v619 = vsel %vm617, %v614, 0
        %v622 = vsel %vm617, %v615, 0
        %624 = vmatprep.subr.bf16.mxu0 0
        %625 = vmatpush1.bf16.xpose.msra.mxu0 %v622
        %626 = vmatprep.subr.bf16.mxu0 0
        %627 = vmatpush1.bf16.xpose.msra.mxu0 0
        %628 = vmatprep.subr.bf16.mxu0 0
        %629 = vmatpush1.bf16.xpose.msra.mxu0 0
        %630 = vmatprep.subr.bf16.mxu0 0
        %631 = vmatpush1.bf16.xpose.msra.mxu0 0
        %632 = vmatprep.subr.bf16.mxu0 0
        %633 = vmatpush1.bf16.xpose.msra.mxu0 0
        %634 = vmatprep.subr.bf16.mxu0 0
        %635 = vmatpush1.bf16.xpose.msra.mxu0 0
        %636 = vmatprep.subr.bf16.mxu0 0
        %637 = vmatpush1.bf16.xpose.msra.mxu0 0
        %638 = vmatprep.subr.bf16.mxu0 0
        %639 = vmatpush1.bf16.xpose.msra.mxu0 0
        %640 = vmatprep.subr.bf16.mxu0 0
        %641 = vmatpush1.bf16.xpose.msra.mxu0 0
        %642 = vmatprep.subr.bf16.mxu0 0
        %643 = vmatpush1.bf16.xpose.msra.mxu0 0
        %644 = vmatprep.subr.bf16.mxu0 0
        %645 = vmatpush1.bf16.xpose.msra.mxu0 0
        %646 = vmatprep.subr.bf16.mxu0 0
        %647 = vmatpush1.bf16.xpose.msra.mxu0 0
        %648 = vmatprep.subr.bf16.mxu0 0
        %649 = vmatpush1.bf16.xpose.msra.mxu0 0
        %650 = vmatprep.subr.bf16.mxu0 0
        %651 = vmatpush1.bf16.xpose.msra.mxu0 0
        %652 = vmatprep.subr.bf16.mxu0 0
        %653 = vmatpush1.bf16.xpose.msra.mxu0 0
        %654 = vmatprep.subr.bf16.mxu0 0
        %655 = vmatpush1.bf16.xpose.msra.mxu0 0
        %656 = vmatprep.mubr.bf16.mxu0 0
        %657 = vmatmul.mubr.bf16.gmra.mrb[0].mxu0 %v619
        %v658 = vpop.f32.mrb[0].mxu0
        %v659 = vadd.f32 0.0, %v658
        %v660 = vpop.f32.mrb[0].mxu0
        %v661 = vpop.f32.mrb[0].mxu0
        %v662 = vpop.f32.mrb[0].mxu0
        %663 = vdwg.mxu0
        %vm664 = vcmask 130048
        %v665 = vsel %vm664, %v659, -inf
        %666 = vmax.xlane.f32.xlu0 %v665
        %v667 = vpop.xlane.xlu0 %666
        %v668 = vsub.f32 %v659, %v667
        %v669 = vmul.f32 %v668, 1.442695
        %v670 = vpow.pop %v669
        %v671 = vsel %vm664, %v670, 0.0
        %672 = vadd.xlane.f32.xlu0 %v671
        %v673 = vpop.xlane.xlu0 %672
        %v674 = vpack.c.bf16 %v670, %v670
        %v676 = vsel %vm664, %v674, 0
        %678 = vmatprep.subr.bf16.mxu0 0
        %679 = vmatpush1.bf16.msra.mxu0 %v616
        %680 = vmatprep.subr.bf16.mxu0 0
        %681 = vmatpush1.bf16.msra.mxu0 0
        %682 = vmatprep.subr.bf16.mxu0 0
        %683 = vmatpush1.bf16.msra.mxu0 0
        %684 = vmatprep.subr.bf16.mxu0 0
        %685 = vmatpush1.bf16.msra.mxu0 0
        %686 = vmatprep.subr.bf16.mxu0 0
        %687 = vmatpush1.bf16.msra.mxu0 0
        %688 = vmatprep.subr.bf16.mxu0 0
        %689 = vmatpush1.bf16.msra.mxu0 0
        %690 = vmatprep.subr.bf16.mxu0 0
        %691 = vmatpush1.bf16.msra.mxu0 0
        %692 = vmatprep.subr.bf16.mxu0 0
        %693 = vmatpush1.bf16.msra.mxu0 0
        %694 = vmatprep.subr.bf16.mxu0 0
        %695 = vmatpush1.bf16.msra.mxu0 0
        %696 = vmatprep.subr.bf16.mxu0 0
        %697 = vmatpush1.bf16.msra.mxu0 0
        %698 = vmatprep.subr.bf16.mxu0 0
        %699 = vmatpush1.bf16.msra.mxu0 0
        %700 = vmatprep.subr.bf16.mxu0 0
        %701 = vmatpush1.bf16.msra.mxu0 0
        %702 = vmatprep.subr.bf16.mxu0 0
        %703 = vmatpush1.bf16.msra.mxu0 0
        %704 = vmatprep.subr.bf16.mxu0 0
        %705 = vmatpush1.bf16.msra.mxu0 0
        %706 = vmatprep.subr.bf16.mxu0 0
        %707 = vmatpush1.bf16.msra.mxu0 0
        %708 = vmatprep.subr.bf16.mxu0 0
        %709 = vmatpush1.bf16.msra.mxu0 0
        %710 = vmatprep.mubr.bf16.mxu0 0
        %711 = vmatmul.mubr.bf16.gmra.mrb[0].mxu0 %v676
        %v712 = vpop.f32.mrb[0].mxu0
        %v713 = vadd.f32 0.0, %v712
        %v714 = vpop.f32.mrb[0].mxu0
        %v715 = vpop.f32.mrb[0].mxu0
        %v716 = vpop.f32.mrb[0].mxu0
        %717 = vdwg.mxu0
        %v718 = vrcp.pop %v673
        %v719 = vmul.f32 %v713, %v718
        %v720 = vpack.c.bf16 %v719, %v719
        %vm721 = vcmask 60416
        %722 = vst.msk [vmem:[#allocation4] sm:$0xf] %vm721, %v720
        %v723 = vld [vmem:[#allocation2] sm:$0xff]
        %v724 = vld [vmem:[#allocation3] sm:$0xff]
        %726 = vrot.lane.b32.xlu0 %v614, 120
        %v727 = vpop.permute.xlu0 %726
        %729 = vrot.lane.b32.xlu0 %v723, 120
        %v730 = vpop.permute.xlu0 %729
        %v732 = vsel %vm617, %v727, 0
        %v735 = vsel %vm617, %v730, 0
        %737 = vmatprep.subr.bf16.mxu0 0
        %738 = vmatpush1.bf16.xpose.msra.mxu0 %v735
        %739 = vmatprep.subr.bf16.mxu0 0
        %740 = vmatpush1.bf16.xpose.msra.mxu0 0
        %741 = vmatprep.subr.bf16.mxu0 0
        %742 = vmatpush1.bf16.xpose.msra.mxu0 0
        %743 = vmatprep.subr.bf16.mxu0 0
        %744 = vmatpush1.bf16.xpose.msra.mxu0 0
        %745 = vmatprep.subr.bf16.mxu0 0
        %746 = vmatpush1.bf16.xpose.msra.mxu0 0
        %747 = vmatprep.subr.bf16.mxu0 0
        %748 = vmatpush1.bf16.xpose.msra.mxu0 0
        %749 = vmatprep.subr.bf16.mxu0 0
        %750 = vmatpush1.bf16.xpose.msra.mxu0 0
        %751 = vmatprep.subr.bf16.mxu0 0
        %752 = vmatpush1.bf16.xpose.msra.mxu0 0
        %753 = vmatprep.subr.bf16.mxu0 0
        %754 = vmatpush1.bf16.xpose.msra.mxu0 0
        %755 = vmatprep.subr.bf16.mxu0 0
        %756 = vmatpush1.bf16.xpose.msra.mxu0 0
        %757 = vmatprep.subr.bf16.mxu0 0
        %758 = vmatpush1.bf16.xpose.msra.mxu0 0
        %759 = vmatprep.subr.bf16.mxu0 0
        %760 = vmatpush1.bf16.xpose.msra.mxu0 0
        %761 = vmatprep.subr.bf16.mxu0 0
        %762 = vmatpush1.bf16.xpose.msra.mxu0 0
        %763 = vmatprep.subr.bf16.mxu0 0
        %764 = vmatpush1.bf16.xpose.msra.mxu0 0
        %765 = vmatprep.subr.bf16.mxu0 0
        %766 = vmatpush1.bf16.xpose.msra.mxu0 0
        %767 = vmatprep.subr.bf16.mxu0 0
        %768 = vmatpush1.bf16.xpose.msra.mxu0 0
        %769 = vmatprep.mubr.bf16.mxu0 0
        %770 = vmatmul.mubr.bf16.gmra.mrb[0].mxu0 %v732
        %v771 = vpop.f32.mrb[0].mxu0
        %v772 = vadd.f32 0.0, %v771
        %v773 = vpop.f32.mrb[0].mxu0
        %v774 = vpop.f32.mrb[0].mxu0
        %v775 = vpop.f32.mrb[0].mxu0
        %776 = vdwg.mxu0
        %v777 = vsel %vm664, %v772, -inf
        %778 = vmax.xlane.f32.xlu0 %v777
        %v779 = vpop.xlane.xlu0 %778
        %v780 = vsub.f32 %v772, %v779
        %v781 = vmul.f32 %v780, 1.442695
        %v782 = vpow.pop %v781
        %v783 = vsel %vm664, %v782, 0.0
        %784 = vadd.xlane.f32.xlu0 %v783
        %v785 = vpop.xlane.xlu0 %784
        %v786 = vpack.c.bf16 %v782, %v782
        %788 = vrot.lane.b32.xlu0 %v724, 120
        %v789 = vpop.permute.xlu0 %788
        %v792 = vsel %vm664, %v786, 0
        %794 = vmatprep.subr.bf16.mxu0 0
        %795 = vmatpush1.bf16.msra.mxu0 %v789
        %796 = vmatprep.subr.bf16.mxu0 0
        %797 = vmatpush1.bf16.msra.mxu0 0
        %798 = vmatprep.subr.bf16.mxu0 0
        %799 = vmatpush1.bf16.msra.mxu0 0
        %800 = vmatprep.subr.bf16.mxu0 0
        %801 = vmatpush1.bf16.msra.mxu0 0
        %802 = vmatprep.subr.bf16.mxu0 0
        %803 = vmatpush1.bf16.msra.mxu0 0
        %804 = vmatprep.subr.bf16.mxu0 0
        %805 = vmatpush1.bf16.msra.mxu0 0
        %806 = vmatprep.subr.bf16.mxu0 0
        %807 = vmatpush1.bf16.msra.mxu0 0
        %808 = vmatprep.subr.bf16.mxu0 0
        %809 = vmatpush1.bf16.msra.mxu0 0
        %810 = vmatprep.subr.bf16.mxu0 0
        %811 = vmatpush1.bf16.msra.mxu0 0
        %812 = vmatprep.subr.bf16.mxu0 0
        %813 = vmatpush1.bf16.msra.mxu0 0
        %814 = vmatprep.subr.bf16.mxu0 0
        %815 = vmatpush1.bf16.msra.mxu0 0
        %816 = vmatprep.subr.bf16.mxu0 0
        %817 = vmatpush1.bf16.msra.mxu0 0
        %818 = vmatprep.subr.bf16.mxu0 0
        %819 = vmatpush1.bf16.msra.mxu0 0
        %820 = vmatprep.subr.bf16.mxu0 0
        %821 = vmatpush1.bf16.msra.mxu0 0
        %822 = vmatprep.subr.bf16.mxu0 0
        %823 = vmatpush1.bf16.msra.mxu0 0
        %824 = vmatprep.subr.bf16.mxu0 0
        %825 = vmatpush1.bf16.msra.mxu0 0
        %826 = vmatprep.mubr.bf16.mxu0 0
        %827 = vmatmul.mubr.bf16.gmra.mrb[0].mxu0 %v792
        %v828 = vpop.f32.mrb[0].mxu0
        %v829 = vadd.f32 0.0, %v828
        %v830 = vpop.f32.mrb[0].mxu0
        %v831 = vpop.f32.mrb[0].mxu0
        %v832 = vpop.f32.mrb[0].mxu0
        %833 = vdwg.mxu0
        %v834 = vrcp.pop %v785
        %v835 = vmul.f32 %v829, %v834
        %v836 = vpack.c.bf16 %v835, %v835
        %v838 = vunpack.c.l.b16 %v836
        %v839 = vpack.c.b16 %v838, %v838
        %840 = vrot.lane.b32.xlu0 %v839, 8
        %v841 = vpop.permute.xlu0 %840
        %vm843 = vcmask 126016
        %844 = vst.msk [vmem:[#allocation4] sm:$0xf] %vm843, %v841
        %v845 = vld [vmem:[#allocation2] sm:$0xff]
        %v846 = vld [vmem:[#allocation3] sm:$0xff]
        %847 = vrot.lane.b32.xlu0 %v614, 112
        %v848 = vpop.permute.xlu0 %847
        %850 = vrot.lane.b32.xlu0 %v845, 112
        %v851 = vpop.permute.xlu0 %850
        %v853 = vsel %vm617, %v848, 0
        %v856 = vsel %vm617, %v851, 0
        %858 = vmatprep.subr.bf16.mxu0 0
        %859 = vmatpush1.bf16.xpose.msra.mxu0 %v856
        %860 = vmatprep.subr.bf16.mxu0 0
        %861 = vmatpush1.bf16.xpose.msra.mxu0 0
        %862 = vmatprep.subr.bf16.mxu0 0
        %863 = vmatpush1.bf16.xpose.msra.mxu0 0
        %864 = vmatprep.subr.bf16.mxu0 0
        %865 = vmatpush1.bf16.xpose.msra.mxu0 0
        %866 = vmatprep.subr.bf16.mxu0 0
        %867 = vmatpush1.bf16.xpose.msra.mxu0 0
        %868 = vmatprep.subr.bf16.mxu0 0
        %869 = vmatpush1.bf16.xpose.msra.mxu0 0
        %870 = vmatprep.subr.bf16.mxu0 0
        %871 = vmatpush1.bf16.xpose.msra.mxu0 0
        %872 = vmatprep.subr.bf16.mxu0 0
        %873 = vmatpush1.bf16.xpose.msra.mxu0 0
        %874 = vmatprep.subr.bf16.mxu0 0
        %875 = vmatpush1.bf16.xpose.msra.mxu0 0
        %876 = vmatprep.subr.bf16.mxu0 0
        %877 = vmatpush1.bf16.xpose.msra.mxu0 0
        %878 = vmatprep.subr.bf16.mxu0 0
        %879 = vmatpush1.bf16.xpose.msra.mxu0 0
        %880 = vmatprep.subr.bf16.mxu0 0
        %881 = vmatpush1.bf16.xpose.msra.mxu0 0
        %882 = vmatprep.subr.bf16.mxu0 0
        %883 = vmatpush1.bf16.xpose.msra.mxu0 0
        %884 = vmatprep.subr.bf16.mxu0 0
        %885 = vmatpush1.bf16.xpose.msra.mxu0 0
        %886 = vmatprep.subr.bf16.mxu0 0
        %887 = vmatpush1.bf16.xpose.msra.mxu0 0
        %888 = vmatprep.subr.bf16.mxu0 0
        %889 = vmatpush1.bf16.xpose.msra.mxu0 0
        %890 = vmatprep.mubr.bf16.mxu0 0
        %891 = vmatmul.mubr.bf16.gmra.mrb[0].mxu0 %v853
        %v892 = vpop.f32.mrb[0].mxu0
        %v893 = vadd.f32 0.0, %v892
        %v894 = vpop.f32.mrb[0].mxu0
        %v895 = vpop.f32.mrb[0].mxu0
        %v896 = vpop.f32.mrb[0].mxu0
        %897 = vdwg.mxu0
        %v898 = vsel %vm664, %v893, -inf
        %899 = vmax.xlane.f32.xlu0 %v898
        %v900 = vpop.xlane.xlu0 %899
        %v901 = vsub.f32 %v893, %v900
        %v902 = vmul.f32 %v901, 1.442695
        %v903 = vpow.pop %v902
        %v904 = vsel %vm664, %v903, 0.0
        %905 = vadd.xlane.f32.xlu0 %v904
        %v906 = vpop.xlane.xlu0 %905
        %v907 = vpack.c.bf16 %v903, %v903
        %909 = vrot.lane.b32.xlu0 %v846, 112
        %v910 = vpop.permute.xlu0 %909
        %v913 = vsel %vm664, %v907, 0
        %915 = vmatprep.subr.bf16.mxu0 0
        %916 = vmatpush1.bf16.msra.mxu0 %v910
        %917 = vmatprep.subr.bf16.mxu0 0
        %918 = vmatpush1.bf16.msra.mxu0 0
        %919 = vmatprep.subr.bf16.mxu0 0
        %920 = vmatpush1.bf16.msra.mxu0 0
        %921 = vmatprep.subr.bf16.mxu0 0
        %922 = vmatpush1.bf16.msra.mxu0 0
        %923 = vmatprep.subr.bf16.mxu0 0
        %924 = vmatpush1.bf16.msra.mxu0 0
        %925 = vmatprep.subr.bf16.mxu0 0
        %926 = vmatpush1.bf16.msra.mxu0 0
        %927 = vmatprep.subr.bf16.mxu0 0
        %928 = vmatpush1.bf16.msra.mxu0 0
        %929 = vmatprep.subr.bf16.mxu0 0
        %930 = vmatpush1.bf16.msra.mxu0 0
        %931 = vmatprep.subr.bf16.mxu0 0
        %932 = vmatpush1.bf16.msra.mxu0 0
        %933 = vmatprep.subr.bf16.mxu0 0
        %934 = vmatpush1.bf16.msra.mxu0 0
        %935 = vmatprep.subr.bf16.mxu0 0
        %936 = vmatpush1.bf16.msra.mxu0 0
        %937 = vmatprep.subr.bf16.mxu0 0
        %938 = vmatpush1.bf16.msra.mxu0 0
        %939 = vmatprep.subr.bf16.mxu0 0
        %940 = vmatpush1.bf16.msra.mxu0 0
        %941 = vmatprep.subr.bf16.mxu0 0
        %942 = vmatpush1.bf16.msra.mxu0 0
        %943 = vmatprep.subr.bf16.mxu0 0
        %944 = vmatpush1.bf16.msra.mxu0 0
        %945 = vmatprep.subr.bf16.mxu0 0
        %946 = vmatpush1.bf16.msra.mxu0 0
        %947 = vmatprep.mubr.bf16.mxu0 0
        %948 = vmatmul.mubr.bf16.gmra.mrb[0].mxu0 %v913
        %v949 = vpop.f32.mrb[0].mxu0
        %v950 = vadd.f32 0.0, %v949
        %v951 = vpop.f32.mrb[0].mxu0
        %v952 = vpop.f32.mrb[0].mxu0
        %v953 = vpop.f32.mrb[0].mxu0
        %954 = vdwg.mxu0
        %v955 = vrcp.pop %v906
        %v956 = vmul.f32 %v950, %v955
        %v957 = vpack.c.bf16 %v956, %v956
        %v959 = vunpack.c.l.b16 %v957
        %v960 = vpack.c.b16 %v959, %v959
        %961 = vrot.lane.b32.xlu0 %v960, 16
        %v962 = vpop.permute.xlu0 %961
        %vm964 = vcmask 191616
        %965 = vst.msk [vmem:[#allocation4] sm:$0xf] %vm964, %v962
        %v966 = vld [vmem:[#allocation2] sm:$0xff]
        %v967 = vld [vmem:[#allocation3] sm:$0xff]
        %968 = vrot.lane.b32.xlu0 %v614, 104
        %v969 = vpop.permute.xlu0 %968
        %971 = vrot.lane.b32.xlu0 %v966, 104
        %v972 = vpop.permute.xlu0 %971
        %v974 = vsel %vm617, %v969, 0
        %v977 = vsel %vm617, %v972, 0
        %979 = vmatprep.subr.bf16.mxu0 0
        %980 = vmatpush1.bf16.xpose.msra.mxu0 %v977
        %981 = vmatprep.subr.bf16.mxu0 0
        %982 = vmatpush1.bf16.xpose.msra.mxu0 0
        %983 = vmatprep.subr.bf16.mxu0 0
        %984 = vmatpush1.bf16.xpose.msra.mxu0 0
        %985 = vmatprep.subr.bf16.mxu0 0
        %986 = vmatpush1.bf16.xpose.msra.mxu0 0
        %987 = vmatprep.subr.bf16.mxu0 0
        %988 = vmatpush1.bf16.xpose.msra.mxu0 0
        %989 = vmatprep.subr.bf16.mxu0 0
        %990 = vmatpush1.bf16.xpose.msra.mxu0 0
        %991 = vmatprep.subr.bf16.mxu0 0
        %992 = vmatpush1.bf16.xpose.msra.mxu0 0
        %993 = vmatprep.subr.bf16.mxu0 0
        %994 = vmatpush1.bf16.xpose.msra.mxu0 0
        %995 = vmatprep.subr.bf16.mxu0 0
        %996 = vmatpush1.bf16.xpose.msra.mxu0 0
        %997 = vmatprep.subr.bf16.mxu0 0
        %998 = vmatpush1.bf16.xpose.msra.mxu0 0
        %999 = vmatprep.subr.bf16.mxu0 0
        %1000 = vmatpush1.bf16.xpose.msra.mxu0 0
        %1001 = vmatprep.subr.bf16.mxu0 0
        %1002 = vmatpush1.bf16.xpose.msra.mxu0 0
        %1003 = vmatprep.subr.bf16.mxu0 0
        %1004 = vmatpush1.bf16.xpose.msra.mxu0 0
        %1005 = vmatprep.subr.bf16.mxu0 0
        %1006 = vmatpush1.bf16.xpose.msra.mxu0 0
        %1007 = vmatprep.subr.bf16.mxu0 0
        %1008 = vmatpush1.bf16.xpose.msra.mxu0 0
        %1009 = vmatprep.subr.bf16.mxu0 0
        %1010 = vmatpush1.bf16.xpose.msra.mxu0 0
        %1011 = vmatprep.mubr.bf16.mxu0 0
        %1012 = vmatmul.mubr.bf16.gmra.mrb[0].mxu0 %v974
        %v1013 = vpop.f32.mrb[0].mxu0
        %v1014 = vadd.f32 0.0, %v1013
        %v1015 = vpop.f32.mrb[0].mxu0
        %v1016 = vpop.f32.mrb[0].mxu0
        %v1017 = vpop.f32.mrb[0].mxu0
        %1018 = vdwg.mxu0
        %v1019 = vsel %vm664, %v1014, -inf
        %1020 = vmax.xlane.f32.xlu0 %v1019
        %v1021 = vpop.xlane.xlu0 %1020
        %v1022 = vsub.f32 %v1014, %v1021
        %v1023 = vmul.f32 %v1022, 1.442695
        %v1024 = vpow.pop %v1023
        %v1025 = vsel %vm664, %v1024, 0.0
        %1026 = vadd.xlane.f32.xlu0 %v1025
        %v1027 = vpop.xlane.xlu0 %1026
        %v1028 = vpack.c.bf16 %v1024, %v1024
        %1030 = vrot.lane.b32.xlu0 %v967, 104
        %v1031 = vpop.permute.xlu0 %1030
        %v1034 = vsel %vm664, %v1028, 0
        %1036 = vmatprep.subr.bf16.mxu0 0
        %1037 = vmatpush1.bf16.msra.mxu0 %v1031
        %1038 = vmatprep.subr.bf16.mxu0 0
        %1039 = vmatpush1.bf16.msra.mxu0 0
        %1040 = vmatprep.subr.bf16.mxu0 0
        %1041 = vmatpush1.bf16.msra.mxu0 0
        %1042 = vmatprep.subr.bf16.mxu0 0
        %1043 = vmatpush1.bf16.msra.mxu0 0
        %1044 = vmatprep.subr.bf16.mxu0 0
        %1045 = vmatpush1.bf16.msra.mxu0 0
        %1046 = vmatprep.subr.bf16.mxu0 0
        %1047 = vmatpush1.bf16.msra.mxu0 0
        %1048 = vmatprep.subr.bf16.mxu0 0
        %1049 = vmatpush1.bf16.msra.mxu0 0
        %1050 = vmatprep.subr.bf16.mxu0 0
        %1051 = vmatpush1.bf16.msra.mxu0 0
        %1052 = vmatprep.subr.bf16.mxu0 0
        %1053 = vmatpush1.bf16.msra.mxu0 0
        %1054 = vmatprep.subr.bf16.mxu0 0
        %1055 = vmatpush1.bf16.msra.mxu0 0
        %1056 = vmatprep.subr.bf16.mxu0 0
        %1057 = vmatpush1.bf16.msra.mxu0 0
        %1058 = vmatprep.subr.bf16.mxu0 0
        %1059 = vmatpush1.bf16.msra.mxu0 0
        %1060 = vmatprep.subr.bf16.mxu0 0
        %1061 = vmatpush1.bf16.msra.mxu0 0
        %1062 = vmatprep.subr.bf16.mxu0 0
        %1063 = vmatpush1.bf16.msra.mxu0 0
        %1064 = vmatprep.subr.bf16.mxu0 0
        %1065 = vmatpush1.bf16.msra.mxu0 0
        %1066 = vmatprep.subr.bf16.mxu0 0
        %1067 = vmatpush1.bf16.msra.mxu0 0
        %1068 = vmatprep.mubr.bf16.mxu0 0
        %1069 = vmatmul.mubr.bf16.gmra.mrb[0].mxu0 %v1034
        %v1070 = vpop.f32.mrb[0].mxu0
        %v1071 = vadd.f32 0.0, %v1070
        %v1072 = vpop.f32.mrb[0].mxu0
        %v1073 = vpop.f32.mrb[0].mxu0
        %v1074 = vpop.f32.mrb[0].mxu0
        %1075 = vdwg.mxu0
        %v1076 = vrcp.pop %v1027
        %v1077 = vmul.f32 %v1071, %v1076
        %v1078 = vpack.c.bf16 %v1077, %v1077
        %v1080 = vunpack.c.l.b16 %v1078
        %v1081 = vpack.c.b16 %v1080, %v1080
        %1082 = vrot.lane.b32.xlu0 %v1081, 24
        %v1083 = vpop.permute.xlu0 %1082
        %vm1085 = vcmask 257216
        %1086 = vst.msk [vmem:[#allocation4] sm:$0xf] %vm1085, %v1083
        %v1087 = vld [vmem:[#allocation4] sm:$0xf]
        %v1088 = vld [vmem:[#allocation13] sm:$0xff]
        %v1089 = vld [vmem:[#allocation13 + $0x8] sm:$0xff]
        %v1090 = vld [vmem:[#allocation13 + $0x10] sm:$0xff]
        %v1091 = vld [vmem:[#allocation13 + $0x18] sm:$0xff]
        %v1092 = vpack.c.bf16 %v1089, %v1088
        %v1093 = vpack.c.bf16 %v1091, %v1090
        %v1094 = vld [vmem:[%s8] sm:$0x1]
        %v1096 = vlaneseq
        %v1097 = vshrl.u32 %v1096, 7
        %v1098 = vsub.s32 0, %v1097
        %v1099 = vrot.slane %v1094, %v1098
        %v1102 = vsel %vm568, %v1087, 0
        %1104 = vmatprep.subr.bf16.mxu0 0
        %1105 = vmatpush1.bf16.msra.mxu0 %v1092
        %1106 = vmatprep.subr.bf16.mxu0 0
        %1107 = vmatpush1.bf16.msra.mxu0 %v1093
        %1108 = vmatprep.subr.bf16.mxu0 0
        %1109 = vmatpush1.bf16.msra.mxu0 0
        %1110 = vmatprep.subr.bf16.mxu0 0
        %1111 = vmatpush1.bf16.msra.mxu0 0
        %1112 = vmatprep.subr.bf16.mxu0 0
        %1113 = vmatpush1.bf16.msra.mxu0 0
        %1114 = vmatprep.subr.bf16.mxu0 0
        %1115 = vmatpush1.bf16.msra.mxu0 0
        %1116 = vmatprep.subr.bf16.mxu0 0
        %1117 = vmatpush1.bf16.msra.mxu0 0
        %1118 = vmatprep.subr.bf16.mxu0 0
        %1119 = vmatpush1.bf16.msra.mxu0 0
        %1120 = vmatprep.subr.bf16.mxu0 0
        %1121 = vmatpush1.bf16.msra.mxu0 0
        %1122 = vmatprep.subr.bf16.mxu0 0
        %1123 = vmatpush1.bf16.msra.mxu0 0
        %1124 = vmatprep.subr.bf16.mxu0 0
        %1125 = vmatpush1.bf16.msra.mxu0 0
        %1126 = vmatprep.subr.bf16.mxu0 0
        %1127 = vmatpush1.bf16.msra.mxu0 0
        %1128 = vmatprep.subr.bf16.mxu0 0
        %1129 = vmatpush1.bf16.msra.mxu0 0
        %1130 = vmatprep.subr.bf16.mxu0 0
        %1131 = vmatpush1.bf16.msra.mxu0 0
        %1132 = vmatprep.subr.bf16.mxu0 0
        %1133 = vmatpush1.bf16.msra.mxu0 0
        %1134 = vmatprep.subr.bf16.mxu0 0
        %1135 = vmatpush1.bf16.msra.mxu0 0
        %1136 = vmatprep.mubr.bf16.mxu0 0
        %1137 = vmatmul.mubr.bf16.gmra.mrb[0].mxu0 %v1102
        %v1138 = vpop.f32.mrb[0].mxu0
        %v1139 = vadd.f32 %v1099, %v1138
        %v1140 = vpop.f32.mrb[0].mxu0
        %v1141 = vpop.f32.mrb[0].mxu0
        %v1142 = vpop.f32.mrb[0].mxu0
        %1143 = vdwg.mxu0
        %v1144 = vmax.f32 %v1139, 0.0
        %1145 = vst.msk [vmem:[%s422] sm:$0xff] %vm568, %v1144
        %s1146 = sand.u32 %s244, 1
        %s1147 = scalar_lea.sflag [#allocation7], %s1146
        %s1148 = sand.u32 %s244, 1
        %s1149 = smul.addr %s1148, 8
        %s1150 = scalar_lea.vmem [#allocation14], %s1149
        // Predicated region
        $region81: #{multi_head_attention.1} parent=55 // pred_check
          %p1151 = pneg %p254
        $region82: #{multi_head_attention.1} parent=55 // pred_check_branch
          %1153 = sbr.rel (%p1151) target = $region84
        $region83: #{multi_head_attention.1} parent=55 // pred_region
          %s1155 = ssub.s32 128, 128
          %1156 = vsyncadd %s1147, %s1155
          %s1157 = smul.addr %s32, 2
          %s1158 = sadd.s32 %s33, %s1157
          %s1159 = smul.addr %s1158, 128
          %s1160 = scalar_lea.hbm %s9, %s1159
          %s1162 = sshll.u32 %s1150, 4
          %s1163 = int_to_ptr.vmem [resolvable:$true] %s1162
          %1165 = dma.vmem_to_hbm [thread:$0]  %s1163, 128, %s1160, %s1147
        $region84: #{multi_head_attention.1} parent=55 // pred_fallthru
          _
      $region56: #{multi_head_attention.1} parent=5 // pred_fallthru
        _
      %p1166 = scmp.le.s32.totalorder 2, %s23
      // Predicated region
      $region85: #{multi_head_attention.1} parent=5 // pred_check
        %p1167 = pneg %p1166
      $region86: #{multi_head_attention.1} parent=5 // pred_check_branch
        %1169 = sbr.rel (%p1167) target = $region88
      $region87: #{multi_head_attention.1} parent=5 // pred_region
        %s1170 = ssub.s32 %s23, 2
        // Predicated region
        $region89: #{multi_head_attention.1} parent=87 // pred_check
          %p1171 = pneg %p260
        $region90: #{multi_head_attention.1} parent=87 // pred_check_branch
          %1173 = sbr.rel (%p1171) target = $region92
        $region91: #{multi_head_attention.1} parent=87 // pred_region
          %s1174 = sand.u32 %s245, 1
          %s1175 = scalar_lea.sflag [#allocation7], %s1174
          %s1176 = sand.u32 %s245, 1
          %s1177 = smul.addr %s1176, 8
          %s1178 = scalar_lea.vmem [#allocation14], %s1177
          %1179 = dma.done %s1175, 128
        $region92: #{multi_head_attention.1} parent=87 // pred_fallthru
          _
      $region88: #{multi_head_attention.1} parent=5 // pred_fallthru
        _
    $region6: #{multi_head_attention.1} parent=1 // loop_footer
      %s27 = sadd.s32 1, %s23
    $region7: #{multi_head_attention.1} parent=1 // loop_footer_branch
      %22 = sbr.rel target = $region3
    $region8: #{multi_head_attention.1} parent=1 // loop_exit
      _
    %1180 = vsyncpa [#allocation6], 1
    %s1181 = scalar_lea.sflag [#allocation6], 1
    %1182 = vsyncpa %s1181, 1
    %1183 = vsyncpa [#allocation9], 1
    %1184 = vsyncpa [#allocation12], 1
    %1185 = vsyncpa [#allocation7], 1
    %s1186 = scalar_lea.sflag [#allocation7], 1
    %1187 = vsyncpa %s1186, 1

</llo_original>
